<compile_context>
chip_gen: v6e
topology: v6e:2x2x1
jax: 0.10.0
libtpu: 0.0.40
codegen_flags: <defaults>
</compile_context>

<pallas_src>
import functools

import jax
import jax.numpy as jnp
from jax import lax
from jax.experimental import pallas as pl
from jax.experimental.pallas import tpu as pltpu


def _round_up(x, m):
    return ((x + m - 1) // m) * m


def gru_predictor_kernel(x_ref, wih_ref, whh_ref, biasf_ref, bhn_ref,
                         wlin_ref, blin_ref, probs_ref,
                         gx_scratch, hs_scratch, h_carry,
                         *, hidden_size, output_classes):
    """One (batch tile, time tile) of: GRU + Linear + grouped softmax.

    x_ref:     (Tt, Bt, D)     time-major inputs (f32 or bf16)
    wih_ref:   (D, 3H)         input->hidden weights (gate order r, z, n)
    whh_ref:   (H, 3H)         hidden->hidden weights (f32, recurrent path)
    biasf_ref: (1, 3H)         b_ih + [b_hh_r, b_hh_z, 0]  (folded biases)
    bhn_ref:   (1, H)          b_hh_n (must stay inside r*(.) per PyTorch GRU)
    wlin_ref:  (H, O_pad)      output weights, zero-padded to 128 lanes
    blin_ref:  (1, O_pad)      output bias, zero-padded
    probs_ref: (Tt, Bt, O_pad) lane-dense output (valid lanes [0, O))
    gx_scratch:(Tt*Bt, 3H) f32 staged input-gate pre-activations
    hs_scratch:(Tt*Bt, H)  f32 GRU output sequence for this time tile
    h_carry:   (Bt, H)     f32 hidden state carried across time tiles
    """
    Tt, Bt, D = x_ref.shape
    H = hidden_size
    O = sum(output_classes)
    O_pad = probs_ref.shape[-1]

    # ---- (0) zero the hidden-state carry at the start of every sequence.
    @pl.when(pl.program_id(1) == 0)
    def _():
        h_carry[...] = jnp.zeros_like(h_carry)

    # ---- (1) input->hidden gates for all timesteps of this tile: one MXU
    # matmul, staged into VMEM scratch so the loop does one aligned load/step.
    x2 = x_ref[...].reshape(Tt * Bt, D)
    gx = jnp.dot(x2, wih_ref[...], preferred_element_type=jnp.float32)
    gx_scratch[...] = gx + biasf_ref[...]          # biases folded in once

    whh = whh_ref[...]                             # resident across the loop
    bhn = jnp.broadcast_to(bhn_ref[...], (Bt, H))  # hoisted broadcast

    # ---- (2) recurrence (unrolled so the tiny MXU matmul latency hides
    # under the VPU gate math).
    def step(t, h):
        row = pl.multiple_of(t * Bt, Bt)
        gx_t = gx_scratch[pl.ds(row, Bt), :]
        gh = jnp.dot(h, whh, preferred_element_type=jnp.float32)
        r = jax.nn.sigmoid(gx_t[:, 0:H] + gh[:, 0:H])
        z = jax.nn.sigmoid(gx_t[:, H:2 * H] + gh[:, H:2 * H])
        n = jnp.tanh(gx_t[:, 2 * H:] + r * (gh[:, 2 * H:] + bhn))
        h_new = (1.0 - z) * n + z * h
        hs_scratch[pl.ds(row, Bt), :] = h_new
        return h_new

    unroll = True if Tt <= 32 else 8
    h_last = lax.fori_loop(0, Tt, step, h_carry[...], unroll=unroll)
    h_carry[...] = h_last                          # carry into next time tile

    # ---- (3) output projection for the whole tile (lane-dense, O_pad=128).
    hs = hs_scratch[...]
    if wlin_ref.dtype == jnp.bfloat16:
        hs = hs.astype(jnp.bfloat16)
    logits = jnp.dot(hs, wlin_ref[...],
                     preferred_element_type=jnp.float32) + blin_ref[...]

    # ---- (4) grouped softmax in one full-width pass over all O_pad lanes:
    # masked per-group max / sum, one exp, one reciprocal, one dense store.
    lane = lax.broadcasted_iota(jnp.int32, (1, O_pad), 1)
    masks = []
    c = 0
    for n_out in output_classes:
        masks.append((lane >= c) & (lane < c + n_out))
        c += n_out

    neg_inf = jnp.float32(-jnp.inf)
    max_per_lane = jnp.zeros_like(logits)
    for m in masks:
        g_max = jnp.max(jnp.where(m, logits, neg_inf), axis=-1, keepdims=True)
        max_per_lane = max_per_lane + jnp.where(m, g_max, 0.0)

    e = jnp.exp(logits - max_per_lane)

    denom_per_lane = jnp.zeros_like(logits)
    for m in masks:
        g_sum = jnp.sum(jnp.where(m, e, 0.0), axis=-1, keepdims=True)
        denom_per_lane = denom_per_lane + jnp.where(m, g_sum, 0.0)

    valid = lane < O                                     # padded lanes -> 0
    denom_per_lane = jnp.where(valid, denom_per_lane, 1.0)
    probs = jnp.where(valid, e * pl.reciprocal(denom_per_lane), 0.0)
    probs_ref[...] = probs.reshape(Tt, Bt, O_pad)


def _vmem_bytes_estimate(Tt, Bt, D, H, O_pad, in_itemsize):
    x_blk = Tt * Bt * D * in_itemsize * 2          # double-buffered stream
    out_blk = Tt * Bt * O_pad * 4 * 2              # double-buffered stream
    weights = (D * 3 * H + H * 3 * H + 3 * H + H + H * O_pad + O_pad) * 4 * 2
    scratch = Tt * Bt * 3 * H * 4 + Tt * Bt * H * 4 + Bt * H * 4
    return x_blk + out_blk + weights + scratch


def rnn_predictor_forward(x, params, output_classes, *, use_bf16=False,
                          batch_tile=None, time_tile=None):
    """x: (B, T, input_size) float32. Returns a list of (B, T, n_i) prob arrays."""
    B, T, D = x.shape
    H = params["w_hh"].shape[0]
    O = sum(output_classes)
    O_pad = _round_up(O, 128)

    in_dtype = jnp.bfloat16 if use_bf16 else jnp.float32
    itemsize = jnp.dtype(in_dtype).itemsize

    # Tile selection: batch tile multiple of 8 sublanes; shrink the time tile
    # first (keeps batch tiles wide for megacore sharding), then the batch
    # tile, until the per-tile VMEM footprint fits a ~40 MiB budget (safe on
    # v7x's 64 MiB physical VMEM).
    vmem_budget = 40 * 1024 * 1024
    Bt = batch_tile if batch_tile is not None else min(128, _round_up(B, 8))
    Bt = max(8, _round_up(Bt, 8))
    Tt = time_tile if time_tile is not None else T
    Tt = max(1, min(Tt, T))
    while Tt > 8 and _vmem_bytes_estimate(Tt, Bt, D, H, O_pad, itemsize) > vmem_budget:
        Tt = (Tt + 1) // 2
    while Bt > 8 and _vmem_bytes_estimate(Tt, Bt, D, H, O_pad, itemsize) > vmem_budget:
        Bt = max(8, _round_up(Bt // 2, 8))

    B_pad = _round_up(B, Bt)
    T_pad = _round_up(T, Tt)
    G = B_pad // Bt
    TG = T_pad // Tt

    est = _vmem_bytes_estimate(Tt, Bt, D, H, O_pad, itemsize)
    vmem_limit = int(min(max(2 * est, 32 * 1024 * 1024), 48 * 1024 * 1024))

    # Glue: pad batch/time (independent rows / trailing steps, sliced off
    # afterwards) + time-major layout.  These wrapper transposes are cheap at
    # these sizes; for mem-bound shapes fold them into producer/consumer.
    x_p = jnp.pad(x, ((0, B_pad - B), (0, T_pad - T), (0, 0)))
    x_tm = jnp.transpose(x_p, (1, 0, 2)).astype(in_dtype)       # (T_pad, B_pad, D)

    w_ih = params["w_ih"].astype(in_dtype)                      # (D, 3H)
    w_hh = params["w_hh"].astype(jnp.float32)                   # (H, 3H)
    b_ih = params["b_ih"].astype(jnp.float32)                   # (1, 3H)
    b_hh = params["b_hh"].astype(jnp.float32)                   # (1, 3H)
    # Fold the r/z hidden biases into the precomputed gates; keep b_hh_n
    # separate (it must sit inside r * (.) per the PyTorch GRU definition).
    bias_fold = b_ih + jnp.concatenate(
        [b_hh[:, :2 * H], jnp.zeros((1, H), jnp.float32)], axis=1)
    b_hh_n = b_hh[:, 2 * H:]                                    # (1, H)

    w_lin = jnp.pad(params["w_lin"],
                    ((0, 0), (0, O_pad - O))).astype(in_dtype)  # (H, O_pad)
    b_lin = jnp.pad(params["b_lin"],
                    ((0, 0), (0, O_pad - O))).astype(jnp.float32)

    kernel = functools.partial(gru_predictor_kernel,
                               hidden_size=H,
                               output_classes=tuple(output_classes))

    probs_tm = pl.pallas_call(
        kernel,
        out_shape=jax.ShapeDtypeStruct((T_pad, B_pad, O_pad), jnp.float32),
        grid_spec=pltpu.PrefetchScalarGridSpec(
            num_scalar_prefetch=0,
            grid=(G, TG),                                       # batch, time
            in_specs=[
                pl.BlockSpec((Tt, Bt, D), lambda i, j: (j, i, 0)),   # streamed
                pl.BlockSpec((D, 3 * H), lambda i, j: (0, 0)),       # resident
                pl.BlockSpec((H, 3 * H), lambda i, j: (0, 0)),
                pl.BlockSpec((1, 3 * H), lambda i, j: (0, 0)),
                pl.BlockSpec((1, H), lambda i, j: (0, 0)),
                pl.BlockSpec((H, O_pad), lambda i, j: (0, 0)),
                pl.BlockSpec((1, O_pad), lambda i, j: (0, 0)),
            ],
            out_specs=pl.BlockSpec((Tt, Bt, O_pad), lambda i, j: (j, i, 0)),
            scratch_shapes=[
                pltpu.VMEM((Tt * Bt, 3 * H), jnp.float32),   # staged gates
                pltpu.VMEM((Tt * Bt, H), jnp.float32),       # GRU outputs
                pltpu.VMEM((Bt, H), jnp.float32),            # hidden-state carry
            ],
        ),
        compiler_params=pltpu.CompilerParams(
            dimension_semantics=("parallel", "arbitrary"),
            vmem_limit_bytes=vmem_limit),
    )(x_tm, w_ih, w_hh, bias_fold, b_hh_n, w_lin, b_lin)

    probs_cat = jnp.transpose(probs_tm, (1, 0, 2))[:B, :T, :O]  # (B, T, O)

    out, c = [], 0
    for n_out in output_classes:
        out.append(probs_cat[:, :, c:c + n_out])
        c += n_out
    return out


def init_params(key, input_size, hidden_size, output_classes):
    """Deterministic init matching torch's U(-1/sqrt(H), 1/sqrt(H)) default."""
    H, D, O = hidden_size, input_size, sum(output_classes)
    bound = 1.0 / jnp.sqrt(jnp.float32(H))
    ks = jax.random.split(key, 6)
    u = lambda k, shape: jax.random.uniform(k, shape, jnp.float32, -bound, bound)
    return {
        "w_ih": u(ks[0], (D, 3 * H)),    # transposed torch weight_ih_l0 (3H, D)
        "w_hh": u(ks[1], (H, 3 * H)),    # transposed torch weight_hh_l0 (3H, H)
        "b_ih": u(ks[2], (1, 3 * H)),
        "b_hh": u(ks[3], (1, 3 * H)),
        "w_lin": u(ks[4], (H, O)),       # transposed torch Linear weight (O, H)
        "b_lin": u(ks[5], (1, O)),
    }


def reference_forward(x, params, output_classes):
    """Pure-JAX f32 reference of the PyTorch forward (correctness check)."""
    B, T, D = x.shape
    H = params["w_hh"].shape[0]
    wih, whh = params["w_ih"], params["w_hh"]
    bih, bhh = params["b_ih"][0], params["b_hh"][0]
    h = jnp.zeros((B, H), jnp.float32)
    hs = []
    for t in range(T):
        gx = x[:, t, :] @ wih + bih
        gh = h @ whh + bhh
        r = jax.nn.sigmoid(gx[:, :H] + gh[:, :H])
        z = jax.nn.sigmoid(gx[:, H:2 * H] + gh[:, H:2 * H])
        n = jnp.tanh(gx[:, 2 * H:] + r * gh[:, 2 * H:])
        h = (1.0 - z) * n + z * h
        hs.append(h)
    hs = jnp.stack(hs, axis=1)
    logits = hs @ params["w_lin"] + params["b_lin"][0]
    out, c = [], 0
    for n_out in output_classes:
        out.append(jax.nn.softmax(logits[:, :, c:c + n_out], axis=2))
        c += n_out
    return out


if __name__ == "__main__":
    # Small shapes consistent with the module: batch=2, seq=8, input=16, hidden=32
    B, T, INPUT_SIZE, HIDDEN = 2, 8, 16, 32
    OUTPUT_CLASSES = (3, 5, 4)

    key = jax.random.PRNGKey(0)
    k_x, k_p = jax.random.split(key)
    x = jax.random.normal(k_x, (B, T, INPUT_SIZE), jnp.float32)
    params = init_params(k_p, INPUT_SIZE, HIDDEN, OUTPUT_CLASSES)
    ref = reference_forward(x, params, OUTPUT_CLASSES)

    # 1) f32 path: must match the PyTorch-equivalent reference tightly.
    probs = jax.block_until_ready(
        rnn_predictor_forward(x, params, OUTPUT_CLASSES, use_bf16=False))
    for p, r in zip(probs, ref):
        assert p.shape == r.shape
        assert jnp.allclose(p, r, atol=1e-5, rtol=1e-5), (
            f"f32 mismatch: max abs diff {jnp.max(jnp.abs(p - r))}")
        assert jnp.allclose(jnp.sum(p, axis=2), 1.0, atol=1e-5)

    # 2) bf16-MXU path (perf configuration): relaxed tolerance vs f32 reference.
    probs_bf16 = jax.block_until_ready(
        rnn_predictor_forward(x, params, OUTPUT_CLASSES, use_bf16=True))
    for p, r in zip(probs_bf16, ref):
        assert p.shape == r.shape
        assert jnp.allclose(p, r, atol=3e-2), (
            f"bf16 mismatch: max abs diff {jnp.max(jnp.abs(p - r))}")
        assert jnp.allclose(jnp.sum(p, axis=2), 1.0, atol=1e-4)

    # 3) Exercise the batch grid (>1 tile) + batch-padding path.
    x_big = jax.random.normal(jax.random.PRNGKey(1), (16, T, INPUT_SIZE), jnp.float32)
    ref_big = reference_forward(x_big, params, OUTPUT_CLASSES)
    probs_big = jax.block_until_ready(
        rnn_predictor_forward(x_big, params, OUTPUT_CLASSES,
                              use_bf16=False, batch_tile=8))
    for p, r in zip(probs_big, ref_big):
        assert p.shape == r.shape
        assert jnp.allclose(p, r, atol=1e-5, rtol=1e-5), (
            f"grid mismatch: max abs diff {jnp.max(jnp.abs(p - r))}")

    # 4) Exercise the time-tiled path with hidden-state carry + T padding
    #    (grid = (2, 3), T_pad = 12 > T = 10).
    x_t = jax.random.normal(jax.random.PRNGKey(2), (16, 10, INPUT_SIZE), jnp.float32)
    ref_t = reference_forward(x_t, params, OUTPUT_CLASSES)
    probs_t = jax.block_until_ready(
        rnn_predictor_forward(x_t, params, OUTPUT_CLASSES,
                              use_bf16=False, batch_tile=8, time_tile=4))
    for p, r in zip(probs_t, ref_t):
        assert p.shape == r.shape
        assert jnp.allclose(p, r, atol=1e-5, rtol=1e-5), (
            f"time-tile mismatch: max abs diff {jnp.max(jnp.abs(p - r))}")

    print("KERNEL_OK")
</pallas_src>

<mosaic_0001>
module attributes {stable_mosaic.version = 11 : i64} {
  func.func @gru_predictor_kernel(%arg0: i32, %arg1: i32, %arg2: memref<8x8x16xf32, #tpu.memory_space<vmem>>, %arg3: memref<16x96xf32, #tpu.memory_space<vmem>>, %arg4: memref<32x96xf32, #tpu.memory_space<vmem>>, %arg5: memref<1x96xf32, #tpu.memory_space<vmem>>, %arg6: memref<1x32xf32, #tpu.memory_space<vmem>>, %arg7: memref<32x128xf32, #tpu.memory_space<vmem>>, %arg8: memref<1x128xf32, #tpu.memory_space<vmem>>, %arg9: memref<8x8x128xf32, #tpu.memory_space<vmem>>, %arg10: memref<64x96xf32, #tpu.memory_space<vmem>>, %arg11: memref<64x32xf32, #tpu.memory_space<vmem>>, %arg12: memref<8x32xf32, #tpu.memory_space<vmem>>) attributes {dimension_semantics = [#tpu.dimension_semantics<parallel>, #tpu.dimension_semantics<arbitrary>], iteration_bounds = array<i64: 1, 1>, scalar_prefetch = 0 : i64, scratch_operands = 3 : i64, tpu.core_type = #tpu.core_type<tc>, window_params = [{transform_indices = @transform_0, window_bounds = array<i64: 8, 8, 16>}, {pipeline_mode = #tpu.pipeline_mode<synchronous>, transform_indices = @transform_1, window_bounds = array<i64: 16, 96>}, {pipeline_mode = #tpu.pipeline_mode<synchronous>, transform_indices = @transform_2, window_bounds = array<i64: 32, 96>}, {pipeline_mode = #tpu.pipeline_mode<synchronous>, transform_indices = @transform_3, window_bounds = array<i64: 1, 96>}, {pipeline_mode = #tpu.pipeline_mode<synchronous>, transform_indices = @transform_4, window_bounds = array<i64: 1, 32>}, {pipeline_mode = #tpu.pipeline_mode<synchronous>, transform_indices = @transform_5, window_bounds = array<i64: 32, 128>}, {pipeline_mode = #tpu.pipeline_mode<synchronous>, transform_indices = @transform_6, window_bounds = array<i64: 1, 128>}, {transform_indices = @transform_7, window_bounds = array<i64: 8, 8, 128>}]} {
    %c0_i32 = arith.constant 0 : i32
    %0 = arith.cmpi eq, %arg1, %c0_i32 : i32
    %1 = arith.extui %0 : i1 to i32
    %c0_i32_0 = arith.constant 0 : i32
    %2 = arith.cmpi ne, %1, %c0_i32_0 : i32
    scf.if %2 {
      %cst_112 = arith.constant 0.000000e+00 : f32
      %407 = vector.broadcast %cst_112 : f32 to vector<8x32xf32>
      %c0_113 = arith.constant 0 : index
      %c0_114 = arith.constant 0 : index
      %408 = vector.load %arg12[%c0_113, %c0_114] : memref<8x32xf32, #tpu.memory_space<vmem>>, vector<8x32xf32>
      tpu.vector_store %arg12[%c0_113, %c0_114], %407 {strides = array<i32>} : memref<8x32xf32, #tpu.memory_space<vmem>>, vector<8x32xf32>,
    } else {
    }
    %c0 = arith.constant 0 : index
    %c0_1 = arith.constant 0 : index
    %c0_2 = arith.constant 0 : index
    %3 = vector.load %arg2[%c0, %c0_1, %c0_2] : memref<8x8x16xf32, #tpu.memory_space<vmem>>, vector<8x8x16xf32>
    %4 = vector.shape_cast %3 : vector<8x8x16xf32> to vector<64x16xf32>
    %c0_3 = arith.constant 0 : index
    %c0_4 = arith.constant 0 : index
    %5 = vector.load %arg3[%c0_3, %c0_4] : memref<16x96xf32, #tpu.memory_space<vmem>>, vector<16x96xf32>
    %cst = arith.constant dense<0.000000e+00> : vector<64x96xf32>
    %6 = tpu.matmul %4, %5, %cst {dimension_numbers = #tpu.dot_dimension_numbers<[1], [0], [0], [1], [0, 0, 1, 1], [], []>} : vector<64x16xf32>, vector<16x96xf32>, vector<64x96xf32> -> vector<64x96xf32>
    %c0_5 = arith.constant 0 : index
    %c0_6 = arith.constant 0 : index
    %7 = vector.load %arg5[%c0_5, %c0_6] : memref<1x96xf32, #tpu.memory_space<vmem>>, vector<1x96xf32>
    %8 = vector.broadcast %7 : vector<1x96xf32> to vector<64x96xf32>
    %9 = arith.addf %6, %8 : vector<64x96xf32>
    %c0_7 = arith.constant 0 : index
    %c0_8 = arith.constant 0 : index
    %10 = vector.load %arg10[%c0_7, %c0_8] : memref<64x96xf32, #tpu.memory_space<vmem>>, vector<64x96xf32>
    tpu.vector_store %arg10[%c0_7, %c0_8], %9 {strides = array<i32>} : memref<64x96xf32, #tpu.memory_space<vmem>>, vector<64x96xf32>,
    %c0_9 = arith.constant 0 : index
    %c0_10 = arith.constant 0 : index
    %11 = vector.load %arg4[%c0_9, %c0_10] : memref<32x96xf32, #tpu.memory_space<vmem>>, vector<32x96xf32>
    %c0_11 = arith.constant 0 : index
    %c0_12 = arith.constant 0 : index
    %12 = vector.load %arg6[%c0_11, %c0_12] : memref<1x32xf32, #tpu.memory_space<vmem>>, vector<1x32xf32>
    %13 = vector.shape_cast %12 : vector<1x32xf32> to vector<1x32xf32>
    %14 = vector.broadcast %13 : vector<1x32xf32> to vector<8x32xf32>
    %c0_13 = arith.constant 0 : index
    %c0_14 = arith.constant 0 : index
    %15 = vector.load %arg12[%c0_13, %c0_14] : memref<8x32xf32, #tpu.memory_space<vmem>>, vector<8x32xf32>
    %c0_i32_15 = arith.constant 0 : i32
    %c8_i32 = arith.constant 8 : i32
    %16 = arith.muli %c0_i32_15, %c8_i32 : i32
    %17 = tpu.assume_multiple %16, 8 : i32
    %18 = arith.index_cast %17 : i32 to index
    %c0_16 = arith.constant 0 : index
    %19 = vector.load %arg10[%18, %c0_16] : memref<64x96xf32, #tpu.memory_space<vmem>>, vector<8x96xf32>
    %cst_17 = arith.constant dense<0.000000e+00> : vector<8x96xf32>
    %20 = tpu.matmul %15, %11, %cst_17 {dimension_numbers = #tpu.dot_dimension_numbers<[1], [0], [0], [1], [0, 0, 1, 1], [], []>} : vector<8x32xf32>, vector<32x96xf32>, vector<8x96xf32> -> vector<8x96xf32>
    %21 = vector.extract_strided_slice %19 {offsets = [0, 0], sizes = [8, 32], strides = [1, 1]} : vector<8x96xf32> to vector<8x32xf32>
    %22 = vector.extract_strided_slice %20 {offsets = [0, 0], sizes = [8, 32], strides = [1, 1]} : vector<8x96xf32> to vector<8x32xf32>
    %23 = arith.addf %21, %22 : vector<8x32xf32>
    %24 = arith.negf %23 : vector<8x32xf32>
    %25 = math.exp %24 : vector<8x32xf32>
    %cst_18 = arith.constant 1.000000e+00 : f32
    %26 = vector.broadcast %cst_18 : f32 to vector<8x32xf32>
    %27 = arith.addf %26, %25 : vector<8x32xf32>
    %28 = arith.divf %26, %27 : vector<8x32xf32>
    %29 = vector.extract_strided_slice %19 {offsets = [0, 32], sizes = [8, 32], strides = [1, 1]} : vector<8x96xf32> to vector<8x32xf32>
    %30 = vector.extract_strided_slice %20 {offsets = [0, 32], sizes = [8, 32], strides = [1, 1]} : vector<8x96xf32> to vector<8x32xf32>
    %31 = arith.addf %29, %30 : vector<8x32xf32>
    %32 = arith.negf %31 : vector<8x32xf32>
    %33 = math.exp %32 : vector<8x32xf32>
    %cst_19 = arith.constant 1.000000e+00 : f32
    %34 = vector.broadcast %cst_19 : f32 to vector<8x32xf32>
    %35 = arith.addf %34, %33 : vector<8x32xf32>
    %36 = arith.divf %34, %35 : vector<8x32xf32>
    %37 = vector.extract_strided_slice %19 {offsets = [0, 64], sizes = [8, 32], strides = [1, 1]} : vector<8x96xf32> to vector<8x32xf32>
    %38 = vector.extract_strided_slice %20 {offsets = [0, 64], sizes = [8, 32], strides = [1, 1]} : vector<8x96xf32> to vector<8x32xf32>
    %39 = arith.addf %38, %14 : vector<8x32xf32>
    %40 = arith.mulf %28, %39 : vector<8x32xf32>
    %41 = arith.addf %37, %40 : vector<8x32xf32>
    %42 = math.tanh %41 : vector<8x32xf32>
    %cst_20 = arith.constant 1.000000e+00 : f32
    %43 = vector.broadcast %cst_20 : f32 to vector<8x32xf32>
    %44 = arith.subf %43, %36 : vector<8x32xf32>
    %45 = arith.mulf %44, %42 : vector<8x32xf32>
    %46 = arith.mulf %36, %15 : vector<8x32xf32>
    %47 = arith.addf %45, %46 : vector<8x32xf32>
    %48 = arith.index_cast %17 : i32 to index
    %c0_21 = arith.constant 0 : index
    %49 = vector.load %arg11[%48, %c0_21] : memref<64x32xf32, #tpu.memory_space<vmem>>, vector<8x32xf32>
    tpu.vector_store %arg11[%48, %c0_21], %47 {strides = array<i32>} : memref<64x32xf32, #tpu.memory_space<vmem>>, vector<8x32xf32>,
    %c1_i32 = arith.constant 1 : i32
    %c8_i32_22 = arith.constant 8 : i32
    %50 = arith.muli %c1_i32, %c8_i32_22 : i32
    %51 = tpu.assume_multiple %50, 8 : i32
    %52 = arith.index_cast %51 : i32 to index
    %c0_23 = arith.constant 0 : index
    %53 = vector.load %arg10[%52, %c0_23] : memref<64x96xf32, #tpu.memory_space<vmem>>, vector<8x96xf32>
    %cst_24 = arith.constant dense<0.000000e+00> : vector<8x96xf32>
    %54 = tpu.matmul %47, %11, %cst_24 {dimension_numbers = #tpu.dot_dimension_numbers<[1], [0], [0], [1], [0, 0, 1, 1], [], []>} : vector<8x32xf32>, vector<32x96xf32>, vector<8x96xf32> -> vector<8x96xf32>
    %55 = vector.extract_strided_slice %53 {offsets = [0, 0], sizes = [8, 32], strides = [1, 1]} : vector<8x96xf32> to vector<8x32xf32>
    %56 = vector.extract_strided_slice %54 {offsets = [0, 0], sizes = [8, 32], strides = [1, 1]} : vector<8x96xf32> to vector<8x32xf32>
    %57 = arith.addf %55, %56 : vector<8x32xf32>
    %58 = arith.negf %57 : vector<8x32xf32>
    %59 = math.exp %58 : vector<8x32xf32>
    %cst_25 = arith.constant 1.000000e+00 : f32
    %60 = vector.broadcast %cst_25 : f32 to vector<8x32xf32>
    %61 = arith.addf %60, %59 : vector<8x32xf32>
    %62 = arith.divf %60, %61 : vector<8x32xf32>
    %63 = vector.extract_strided_slice %53 {offsets = [0, 32], sizes = [8, 32], strides = [1, 1]} : vector<8x96xf32> to vector<8x32xf32>
    %64 = vector.extract_strided_slice %54 {offsets = [0, 32], sizes = [8, 32], strides = [1, 1]} : vector<8x96xf32> to vector<8x32xf32>
    %65 = arith.addf %63, %64 : vector<8x32xf32>
    %66 = arith.negf %65 : vector<8x32xf32>
    %67 = math.exp %66 : vector<8x32xf32>
    %cst_26 = arith.constant 1.000000e+00 : f32
    %68 = vector.broadcast %cst_26 : f32 to vector<8x32xf32>
    %69 = arith.addf %68, %67 : vector<8x32xf32>
    %70 = arith.divf %68, %69 : vector<8x32xf32>
    %71 = vector.extract_strided_slice %53 {offsets = [0, 64], sizes = [8, 32], strides = [1, 1]} : vector<8x96xf32> to vector<8x32xf32>
    %72 = vector.extract_strided_slice %54 {offsets = [0, 64], sizes = [8, 32], strides = [1, 1]} : vector<8x96xf32> to vector<8x32xf32>
    %73 = arith.addf %72, %14 : vector<8x32xf32>
    %74 = arith.mulf %62, %73 : vector<8x32xf32>
    %75 = arith.addf %71, %74 : vector<8x32xf32>
    %76 = math.tanh %75 : vector<8x32xf32>
    %cst_27 = arith.constant 1.000000e+00 : f32
    %77 = vector.broadcast %cst_27 : f32 to vector<8x32xf32>
    %78 = arith.subf %77, %70 : vector<8x32xf32>
    %79 = arith.mulf %78, %76 : vector<8x32xf32>
    %80 = arith.mulf %70, %47 : vector<8x32xf32>
    %81 = arith.addf %79, %80 : vector<8x32xf32>
    %82 = arith.index_cast %51 : i32 to index
    %c0_28 = arith.constant 0 : index
    %83 = vector.load %arg11[%82, %c0_28] : memref<64x32xf32, #tpu.memory_space<vmem>>, vector<8x32xf32>
    tpu.vector_store %arg11[%82, %c0_28], %81 {strides = array<i32>} : memref<64x32xf32, #tpu.memory_space<vmem>>, vector<8x32xf32>,
    %c2_i32 = arith.constant 2 : i32
    %c8_i32_29 = arith.constant 8 : i32
    %84 = arith.muli %c2_i32, %c8_i32_29 : i32
    %85 = tpu.assume_multiple %84, 8 : i32
    %86 = arith.index_cast %85 : i32 to index
    %c0_30 = arith.constant 0 : index
    %87 = vector.load %arg10[%86, %c0_30] : memref<64x96xf32, #tpu.memory_space<vmem>>, vector<8x96xf32>
    %cst_31 = arith.constant dense<0.000000e+00> : vector<8x96xf32>
    %88 = tpu.matmul %81, %11, %cst_31 {dimension_numbers = #tpu.dot_dimension_numbers<[1], [0], [0], [1], [0, 0, 1, 1], [], []>} : vector<8x32xf32>, vector<32x96xf32>, vector<8x96xf32> -> vector<8x96xf32>
    %89 = vector.extract_strided_slice %87 {offsets = [0, 0], sizes = [8, 32], strides = [1, 1]} : vector<8x96xf32> to vector<8x32xf32>
    %90 = vector.extract_strided_slice %88 {offsets = [0, 0], sizes = [8, 32], strides = [1, 1]} : vector<8x96xf32> to vector<8x32xf32>
    %91 = arith.addf %89, %90 : vector<8x32xf32>
    %92 = arith.negf %91 : vector<8x32xf32>
    %93 = math.exp %92 : vector<8x32xf32>
    %cst_32 = arith.constant 1.000000e+00 : f32
    %94 = vector.broadcast %cst_32 : f32 to vector<8x32xf32>
    %95 = arith.addf %94, %93 : vector<8x32xf32>
    %96 = arith.divf %94, %95 : vector<8x32xf32>
    %97 = vector.extract_strided_slice %87 {offsets = [0, 32], sizes = [8, 32], strides = [1, 1]} : vector<8x96xf32> to vector<8x32xf32>
    %98 = vector.extract_strided_slice %88 {offsets = [0, 32], sizes = [8, 32], strides = [1, 1]} : vector<8x96xf32> to vector<8x32xf32>
    %99 = arith.addf %97, %98 : vector<8x32xf32>
    %100 = arith.negf %99 : vector<8x32xf32>
    %101 = math.exp %100 : vector<8x32xf32>
    %cst_33 = arith.constant 1.000000e+00 : f32
    %102 = vector.broadcast %cst_33 : f32 to vector<8x32xf32>
    %103 = arith.addf %102, %101 : vector<8x32xf32>
    %104 = arith.divf %102, %103 : vector<8x32xf32>
    %105 = vector.extract_strided_slice %87 {offsets = [0, 64], sizes = [8, 32], strides = [1, 1]} : vector<8x96xf32> to vector<8x32xf32>
    %106 = vector.extract_strided_slice %88 {offsets = [0, 64], sizes = [8, 32], strides = [1, 1]} : vector<8x96xf32> to vector<8x32xf32>
    %107 = arith.addf %106, %14 : vector<8x32xf32>
    %108 = arith.mulf %96, %107 : vector<8x32xf32>
    %109 = arith.addf %105, %108 : vector<8x32xf32>
    %110 = math.tanh %109 : vector<8x32xf32>
    %cst_34 = arith.constant 1.000000e+00 : f32
    %111 = vector.broadcast %cst_34 : f32 to vector<8x32xf32>
    %112 = arith.subf %111, %104 : vector<8x32xf32>
    %113 = arith.mulf %112, %110 : vector<8x32xf32>
    %114 = arith.mulf %104, %81 : vector<8x32xf32>
    %115 = arith.addf %113, %114 : vector<8x32xf32>
    %116 = arith.index_cast %85 : i32 to index
    %c0_35 = arith.constant 0 : index
    %117 = vector.load %arg11[%116, %c0_35] : memref<64x32xf32, #tpu.memory_space<vmem>>, vector<8x32xf32>
    tpu.vector_store %arg11[%116, %c0_35], %115 {strides = array<i32>} : memref<64x32xf32, #tpu.memory_space<vmem>>, vector<8x32xf32>,
    %c3_i32 = arith.constant 3 : i32
    %c8_i32_36 = arith.constant 8 : i32
    %118 = arith.muli %c3_i32, %c8_i32_36 : i32
    %119 = tpu.assume_multiple %118, 8 : i32
    %120 = arith.index_cast %119 : i32 to index
    %c0_37 = arith.constant 0 : index
    %121 = vector.load %arg10[%120, %c0_37] : memref<64x96xf32, #tpu.memory_space<vmem>>, vector<8x96xf32>
    %cst_38 = arith.constant dense<0.000000e+00> : vector<8x96xf32>
    %122 = tpu.matmul %115, %11, %cst_38 {dimension_numbers = #tpu.dot_dimension_numbers<[1], [0], [0], [1], [0, 0, 1, 1], [], []>} : vector<8x32xf32>, vector<32x96xf32>, vector<8x96xf32> -> vector<8x96xf32>
    %123 = vector.extract_strided_slice %121 {offsets = [0, 0], sizes = [8, 32], strides = [1, 1]} : vector<8x96xf32> to vector<8x32xf32>
    %124 = vector.extract_strided_slice %122 {offsets = [0, 0], sizes = [8, 32], strides = [1, 1]} : vector<8x96xf32> to vector<8x32xf32>
    %125 = arith.addf %123, %124 : vector<8x32xf32>
    %126 = arith.negf %125 : vector<8x32xf32>
    %127 = math.exp %126 : vector<8x32xf32>
    %cst_39 = arith.constant 1.000000e+00 : f32
    %128 = vector.broadcast %cst_39 : f32 to vector<8x32xf32>
    %129 = arith.addf %128, %127 : vector<8x32xf32>
    %130 = arith.divf %128, %129 : vector<8x32xf32>
    %131 = vector.extract_strided_slice %121 {offsets = [0, 32], sizes = [8, 32], strides = [1, 1]} : vector<8x96xf32> to vector<8x32xf32>
    %132 = vector.extract_strided_slice %122 {offsets = [0, 32], sizes = [8, 32], strides = [1, 1]} : vector<8x96xf32> to vector<8x32xf32>
    %133 = arith.addf %131, %132 : vector<8x32xf32>
    %134 = arith.negf %133 : vector<8x32xf32>
    %135 = math.exp %134 : vector<8x32xf32>
    %cst_40 = arith.constant 1.000000e+00 : f32
    %136 = vector.broadcast %cst_40 : f32 to vector<8x32xf32>
    %137 = arith.addf %136, %135 : vector<8x32xf32>
    %138 = arith.divf %136, %137 : vector<8x32xf32>
    %139 = vector.extract_strided_slice %121 {offsets = [0, 64], sizes = [8, 32], strides = [1, 1]} : vector<8x96xf32> to vector<8x32xf32>
    %140 = vector.extract_strided_slice %122 {offsets = [0, 64], sizes = [8, 32], strides = [1, 1]} : vector<8x96xf32> to vector<8x32xf32>
    %141 = arith.addf %140, %14 : vector<8x32xf32>
    %142 = arith.mulf %130, %141 : vector<8x32xf32>
    %143 = arith.addf %139, %142 : vector<8x32xf32>
    %144 = math.tanh %143 : vector<8x32xf32>
    %cst_41 = arith.constant 1.000000e+00 : f32
    %145 = vector.broadcast %cst_41 : f32 to vector<8x32xf32>
    %146 = arith.subf %145, %138 : vector<8x32xf32>
    %147 = arith.mulf %146, %144 : vector<8x32xf32>
    %148 = arith.mulf %138, %115 : vector<8x32xf32>
    %149 = arith.addf %147, %148 : vector<8x32xf32>
    %150 = arith.index_cast %119 : i32 to index
    %c0_42 = arith.constant 0 : index
    %151 = vector.load %arg11[%150, %c0_42] : memref<64x32xf32, #tpu.memory_space<vmem>>, vector<8x32xf32>
    tpu.vector_store %arg11[%150, %c0_42], %149 {strides = array<i32>} : memref<64x32xf32, #tpu.memory_space<vmem>>, vector<8x32xf32>,
    %c4_i32 = arith.constant 4 : i32
    %c8_i32_43 = arith.constant 8 : i32
    %152 = arith.muli %c4_i32, %c8_i32_43 : i32
    %153 = tpu.assume_multiple %152, 8 : i32
    %154 = arith.index_cast %153 : i32 to index
    %c0_44 = arith.constant 0 : index
    %155 = vector.load %arg10[%154, %c0_44] : memref<64x96xf32, #tpu.memory_space<vmem>>, vector<8x96xf32>
    %cst_45 = arith.constant dense<0.000000e+00> : vector<8x96xf32>
    %156 = tpu.matmul %149, %11, %cst_45 {dimension_numbers = #tpu.dot_dimension_numbers<[1], [0], [0], [1], [0, 0, 1, 1], [], []>} : vector<8x32xf32>, vector<32x96xf32>, vector<8x96xf32> -> vector<8x96xf32>
    %157 = vector.extract_strided_slice %155 {offsets = [0, 0], sizes = [8, 32], strides = [1, 1]} : vector<8x96xf32> to vector<8x32xf32>
    %158 = vector.extract_strided_slice %156 {offsets = [0, 0], sizes = [8, 32], strides = [1, 1]} : vector<8x96xf32> to vector<8x32xf32>
    %159 = arith.addf %157, %158 : vector<8x32xf32>
    %160 = arith.negf %159 : vector<8x32xf32>
    %161 = math.exp %160 : vector<8x32xf32>
    %cst_46 = arith.constant 1.000000e+00 : f32
    %162 = vector.broadcast %cst_46 : f32 to vector<8x32xf32>
    %163 = arith.addf %162, %161 : vector<8x32xf32>
    %164 = arith.divf %162, %163 : vector<8x32xf32>
    %165 = vector.extract_strided_slice %155 {offsets = [0, 32], sizes = [8, 32], strides = [1, 1]} : vector<8x96xf32> to vector<8x32xf32>
    %166 = vector.extract_strided_slice %156 {offsets = [0, 32], sizes = [8, 32], strides = [1, 1]} : vector<8x96xf32> to vector<8x32xf32>
    %167 = arith.addf %165, %166 : vector<8x32xf32>
    %168 = arith.negf %167 : vector<8x32xf32>
    %169 = math.exp %168 : vector<8x32xf32>
    %cst_47 = arith.constant 1.000000e+00 : f32
    %170 = vector.broadcast %cst_47 : f32 to vector<8x32xf32>
    %171 = arith.addf %170, %169 : vector<8x32xf32>
    %172 = arith.divf %170, %171 : vector<8x32xf32>
    %173 = vector.extract_strided_slice %155 {offsets = [0, 64], sizes = [8, 32], strides = [1, 1]} : vector<8x96xf32> to vector<8x32xf32>
    %174 = vector.extract_strided_slice %156 {offsets = [0, 64], sizes = [8, 32], strides = [1, 1]} : vector<8x96xf32> to vector<8x32xf32>
    %175 = arith.addf %174, %14 : vector<8x32xf32>
    %176 = arith.mulf %164, %175 : vector<8x32xf32>
    %177 = arith.addf %173, %176 : vector<8x32xf32>
    %178 = math.tanh %177 : vector<8x32xf32>
    %cst_48 = arith.constant 1.000000e+00 : f32
    %179 = vector.broadcast %cst_48 : f32 to vector<8x32xf32>
    %180 = arith.subf %179, %172 : vector<8x32xf32>
    %181 = arith.mulf %180, %178 : vector<8x32xf32>
    %182 = arith.mulf %172, %149 : vector<8x32xf32>
    %183 = arith.addf %181, %182 : vector<8x32xf32>
    %184 = arith.index_cast %153 : i32 to index
    %c0_49 = arith.constant 0 : index
    %185 = vector.load %arg11[%184, %c0_49] : memref<64x32xf32, #tpu.memory_space<vmem>>, vector<8x32xf32>
    tpu.vector_store %arg11[%184, %c0_49], %183 {strides = array<i32>} : memref<64x32xf32, #tpu.memory_space<vmem>>, vector<8x32xf32>,
    %c5_i32 = arith.constant 5 : i32
    %c8_i32_50 = arith.constant 8 : i32
    %186 = arith.muli %c5_i32, %c8_i32_50 : i32
    %187 = tpu.assume_multiple %186, 8 : i32
    %188 = arith.index_cast %187 : i32 to index
    %c0_51 = arith.constant 0 : index
    %189 = vector.load %arg10[%188, %c0_51] : memref<64x96xf32, #tpu.memory_space<vmem>>, vector<8x96xf32>
    %cst_52 = arith.constant dense<0.000000e+00> : vector<8x96xf32>
    %190 = tpu.matmul %183, %11, %cst_52 {dimension_numbers = #tpu.dot_dimension_numbers<[1], [0], [0], [1], [0, 0, 1, 1], [], []>} : vector<8x32xf32>, vector<32x96xf32>, vector<8x96xf32> -> vector<8x96xf32>
    %191 = vector.extract_strided_slice %189 {offsets = [0, 0], sizes = [8, 32], strides = [1, 1]} : vector<8x96xf32> to vector<8x32xf32>
    %192 = vector.extract_strided_slice %190 {offsets = [0, 0], sizes = [8, 32], strides = [1, 1]} : vector<8x96xf32> to vector<8x32xf32>
    %193 = arith.addf %191, %192 : vector<8x32xf32>
    %194 = arith.negf %193 : vector<8x32xf32>
    %195 = math.exp %194 : vector<8x32xf32>
    %cst_53 = arith.constant 1.000000e+00 : f32
    %196 = vector.broadcast %cst_53 : f32 to vector<8x32xf32>
    %197 = arith.addf %196, %195 : vector<8x32xf32>
    %198 = arith.divf %196, %197 : vector<8x32xf32>
    %199 = vector.extract_strided_slice %189 {offsets = [0, 32], sizes = [8, 32], strides = [1, 1]} : vector<8x96xf32> to vector<8x32xf32>
    %200 = vector.extract_strided_slice %190 {offsets = [0, 32], sizes = [8, 32], strides = [1, 1]} : vector<8x96xf32> to vector<8x32xf32>
    %201 = arith.addf %199, %200 : vector<8x32xf32>
    %202 = arith.negf %201 : vector<8x32xf32>
    %203 = math.exp %202 : vector<8x32xf32>
    %cst_54 = arith.constant 1.000000e+00 : f32
    %204 = vector.broadcast %cst_54 : f32 to vector<8x32xf32>
    %205 = arith.addf %204, %203 : vector<8x32xf32>
    %206 = arith.divf %204, %205 : vector<8x32xf32>
    %207 = vector.extract_strided_slice %189 {offsets = [0, 64], sizes = [8, 32], strides = [1, 1]} : vector<8x96xf32> to vector<8x32xf32>
    %208 = vector.extract_strided_slice %190 {offsets = [0, 64], sizes = [8, 32], strides = [1, 1]} : vector<8x96xf32> to vector<8x32xf32>
    %209 = arith.addf %208, %14 : vector<8x32xf32>
    %210 = arith.mulf %198, %209 : vector<8x32xf32>
    %211 = arith.addf %207, %210 : vector<8x32xf32>
    %212 = math.tanh %211 : vector<8x32xf32>
    %cst_55 = arith.constant 1.000000e+00 : f32
    %213 = vector.broadcast %cst_55 : f32 to vector<8x32xf32>
    %214 = arith.subf %213, %206 : vector<8x32xf32>
    %215 = arith.mulf %214, %212 : vector<8x32xf32>
    %216 = arith.mulf %206, %183 : vector<8x32xf32>
    %217 = arith.addf %215, %216 : vector<8x32xf32>
    %218 = arith.index_cast %187 : i32 to index
    %c0_56 = arith.constant 0 : index
    %219 = vector.load %arg11[%218, %c0_56] : memref<64x32xf32, #tpu.memory_space<vmem>>, vector<8x32xf32>
    tpu.vector_store %arg11[%218, %c0_56], %217 {strides = array<i32>} : memref<64x32xf32, #tpu.memory_space<vmem>>, vector<8x32xf32>,
    %c6_i32 = arith.constant 6 : i32
    %c8_i32_57 = arith.constant 8 : i32
    %220 = arith.muli %c6_i32, %c8_i32_57 : i32
    %221 = tpu.assume_multiple %220, 8 : i32
    %222 = arith.index_cast %221 : i32 to index
    %c0_58 = arith.constant 0 : index
    %223 = vector.load %arg10[%222, %c0_58] : memref<64x96xf32, #tpu.memory_space<vmem>>, vector<8x96xf32>
    %cst_59 = arith.constant dense<0.000000e+00> : vector<8x96xf32>
    %224 = tpu.matmul %217, %11, %cst_59 {dimension_numbers = #tpu.dot_dimension_numbers<[1], [0], [0], [1], [0, 0, 1, 1], [], []>} : vector<8x32xf32>, vector<32x96xf32>, vector<8x96xf32> -> vector<8x96xf32>
    %225 = vector.extract_strided_slice %223 {offsets = [0, 0], sizes = [8, 32], strides = [1, 1]} : vector<8x96xf32> to vector<8x32xf32>
    %226 = vector.extract_strided_slice %224 {offsets = [0, 0], sizes = [8, 32], strides = [1, 1]} : vector<8x96xf32> to vector<8x32xf32>
    %227 = arith.addf %225, %226 : vector<8x32xf32>
    %228 = arith.negf %227 : vector<8x32xf32>
    %229 = math.exp %228 : vector<8x32xf32>
    %cst_60 = arith.constant 1.000000e+00 : f32
    %230 = vector.broadcast %cst_60 : f32 to vector<8x32xf32>
    %231 = arith.addf %230, %229 : vector<8x32xf32>
    %232 = arith.divf %230, %231 : vector<8x32xf32>
    %233 = vector.extract_strided_slice %223 {offsets = [0, 32], sizes = [8, 32], strides = [1, 1]} : vector<8x96xf32> to vector<8x32xf32>
    %234 = vector.extract_strided_slice %224 {offsets = [0, 32], sizes = [8, 32], strides = [1, 1]} : vector<8x96xf32> to vector<8x32xf32>
    %235 = arith.addf %233, %234 : vector<8x32xf32>
    %236 = arith.negf %235 : vector<8x32xf32>
    %237 = math.exp %236 : vector<8x32xf32>
    %cst_61 = arith.constant 1.000000e+00 : f32
    %238 = vector.broadcast %cst_61 : f32 to vector<8x32xf32>
    %239 = arith.addf %238, %237 : vector<8x32xf32>
    %240 = arith.divf %238, %239 : vector<8x32xf32>
    %241 = vector.extract_strided_slice %223 {offsets = [0, 64], sizes = [8, 32], strides = [1, 1]} : vector<8x96xf32> to vector<8x32xf32>
    %242 = vector.extract_strided_slice %224 {offsets = [0, 64], sizes = [8, 32], strides = [1, 1]} : vector<8x96xf32> to vector<8x32xf32>
    %243 = arith.addf %242, %14 : vector<8x32xf32>
    %244 = arith.mulf %232, %243 : vector<8x32xf32>
    %245 = arith.addf %241, %244 : vector<8x32xf32>
    %246 = math.tanh %245 : vector<8x32xf32>
    %cst_62 = arith.constant 1.000000e+00 : f32
    %247 = vector.broadcast %cst_62 : f32 to vector<8x32xf32>
    %248 = arith.subf %247, %240 : vector<8x32xf32>
    %249 = arith.mulf %248, %246 : vector<8x32xf32>
    %250 = arith.mulf %240, %217 : vector<8x32xf32>
    %251 = arith.addf %249, %250 : vector<8x32xf32>
    %252 = arith.index_cast %221 : i32 to index
    %c0_63 = arith.constant 0 : index
    %253 = vector.load %arg11[%252, %c0_63] : memref<64x32xf32, #tpu.memory_space<vmem>>, vector<8x32xf32>
    tpu.vector_store %arg11[%252, %c0_63], %251 {strides = array<i32>} : memref<64x32xf32, #tpu.memory_space<vmem>>, vector<8x32xf32>,
    %c7_i32 = arith.constant 7 : i32
    %c8_i32_64 = arith.constant 8 : i32
    %254 = arith.muli %c7_i32, %c8_i32_64 : i32
    %255 = tpu.assume_multiple %254, 8 : i32
    %256 = arith.index_cast %255 : i32 to index
    %c0_65 = arith.constant 0 : index
    %257 = vector.load %arg10[%256, %c0_65] : memref<64x96xf32, #tpu.memory_space<vmem>>, vector<8x96xf32>
    %cst_66 = arith.constant dense<0.000000e+00> : vector<8x96xf32>
    %258 = tpu.matmul %251, %11, %cst_66 {dimension_numbers = #tpu.dot_dimension_numbers<[1], [0], [0], [1], [0, 0, 1, 1], [], []>} : vector<8x32xf32>, vector<32x96xf32>, vector<8x96xf32> -> vector<8x96xf32>
    %259 = vector.extract_strided_slice %257 {offsets = [0, 0], sizes = [8, 32], strides = [1, 1]} : vector<8x96xf32> to vector<8x32xf32>
    %260 = vector.extract_strided_slice %258 {offsets = [0, 0], sizes = [8, 32], strides = [1, 1]} : vector<8x96xf32> to vector<8x32xf32>
    %261 = arith.addf %259, %260 : vector<8x32xf32>
    %262 = arith.negf %261 : vector<8x32xf32>
    %263 = math.exp %262 : vector<8x32xf32>
    %cst_67 = arith.constant 1.000000e+00 : f32
    %264 = vector.broadcast %cst_67 : f32 to vector<8x32xf32>
    %265 = arith.addf %264, %263 : vector<8x32xf32>
    %266 = arith.divf %264, %265 : vector<8x32xf32>
    %267 = vector.extract_strided_slice %257 {offsets = [0, 32], sizes = [8, 32], strides = [1, 1]} : vector<8x96xf32> to vector<8x32xf32>
    %268 = vector.extract_strided_slice %258 {offsets = [0, 32], sizes = [8, 32], strides = [1, 1]} : vector<8x96xf32> to vector<8x32xf32>
    %269 = arith.addf %267, %268 : vector<8x32xf32>
    %270 = arith.negf %269 : vector<8x32xf32>
    %271 = math.exp %270 : vector<8x32xf32>
    %cst_68 = arith.constant 1.000000e+00 : f32
    %272 = vector.broadcast %cst_68 : f32 to vector<8x32xf32>
    %273 = arith.addf %272, %271 : vector<8x32xf32>
    %274 = arith.divf %272, %273 : vector<8x32xf32>
    %275 = vector.extract_strided_slice %257 {offsets = [0, 64], sizes = [8, 32], strides = [1, 1]} : vector<8x96xf32> to vector<8x32xf32>
    %276 = vector.extract_strided_slice %258 {offsets = [0, 64], sizes = [8, 32], strides = [1, 1]} : vector<8x96xf32> to vector<8x32xf32>
    %277 = arith.addf %276, %14 : vector<8x32xf32>
    %278 = arith.mulf %266, %277 : vector<8x32xf32>
    %279 = arith.addf %275, %278 : vector<8x32xf32>
    %280 = math.tanh %279 : vector<8x32xf32>
    %cst_69 = arith.constant 1.000000e+00 : f32
    %281 = vector.broadcast %cst_69 : f32 to vector<8x32xf32>
    %282 = arith.subf %281, %274 : vector<8x32xf32>
    %283 = arith.mulf %282, %280 : vector<8x32xf32>
    %284 = arith.mulf %274, %251 : vector<8x32xf32>
    %285 = arith.addf %283, %284 : vector<8x32xf32>
    %286 = arith.index_cast %255 : i32 to index
    %c0_70 = arith.constant 0 : index
    %287 = vector.load %arg11[%286, %c0_70] : memref<64x32xf32, #tpu.memory_space<vmem>>, vector<8x32xf32>
    tpu.vector_store %arg11[%286, %c0_70], %285 {strides = array<i32>} : memref<64x32xf32, #tpu.memory_space<vmem>>, vector<8x32xf32>,
    %c8_i32_71 = arith.constant 8 : i32
    %c0_72 = arith.constant 0 : index
    %c0_73 = arith.constant 0 : index
    %288 = vector.load %arg12[%c0_72, %c0_73] : memref<8x32xf32, #tpu.memory_space<vmem>>, vector<8x32xf32>
    tpu.vector_store %arg12[%c0_72, %c0_73], %285 {strides = array<i32>} : memref<8x32xf32, #tpu.memory_space<vmem>>, vector<8x32xf32>,
    %c0_74 = arith.constant 0 : index
    %c0_75 = arith.constant 0 : index
    %289 = vector.load %arg11[%c0_74, %c0_75] : memref<64x32xf32, #tpu.memory_space<vmem>>, vector<64x32xf32>
    %c0_76 = arith.constant 0 : index
    %c0_77 = arith.constant 0 : index
    %290 = vector.load %arg7[%c0_76, %c0_77] : memref<32x128xf32, #tpu.memory_space<vmem>>, vector<32x128xf32>
    %cst_78 = arith.constant dense<0.000000e+00> : vector<64x128xf32>
    %291 = tpu.matmul %289, %290, %cst_78 {dimension_numbers = #tpu.dot_dimension_numbers<[1], [0], [0], [1], [0, 0, 1, 1], [], []>} : vector<64x32xf32>, vector<32x128xf32>, vector<64x128xf32> -> vector<64x128xf32>
    %c0_79 = arith.constant 0 : index
    %c0_80 = arith.constant 0 : index
    %292 = vector.load %arg8[%c0_79, %c0_80] : memref<1x128xf32, #tpu.memory_space<vmem>>, vector<1x128xf32>
    %293 = vector.broadcast %292 : vector<1x128xf32> to vector<64x128xf32>
    %294 = arith.addf %291, %293 : vector<64x128xf32>
    %295 = tpu.iota {dimensions = array<i32: 1>} : vector<1x128xi32>
    %c0_i32_81 = arith.constant 0 : i32
    %296 = vector.broadcast %c0_i32_81 : i32 to vector<1x128xi32>
    %297 = arith.cmpi sge, %295, %296 : vector<1x128xi32>
    %c3_i32_82 = arith.constant 3 : i32
    %298 = vector.broadcast %c3_i32_82 : i32 to vector<1x128xi32>
    %299 = arith.cmpi slt, %295, %298 : vector<1x128xi32>
    %300 = arith.andi %297, %299 : vector<1x128xi1>
    %c3_i32_83 = arith.constant 3 : i32
    %301 = vector.broadcast %c3_i32_83 : i32 to vector<1x128xi32>
    %302 = arith.cmpi sge, %295, %301 : vector<1x128xi32>
    %c8_i32_84 = arith.constant 8 : i32
    %303 = vector.broadcast %c8_i32_84 : i32 to vector<1x128xi32>
    %304 = arith.cmpi slt, %295, %303 : vector<1x128xi32>
    %305 = arith.andi %302, %304 : vector<1x128xi1>
    %c8_i32_85 = arith.constant 8 : i32
    %306 = vector.broadcast %c8_i32_85 : i32 to vector<1x128xi32>
    %307 = arith.cmpi sge, %295, %306 : vector<1x128xi32>
    %c12_i32 = arith.constant 12 : i32
    %308 = vector.broadcast %c12_i32 : i32 to vector<1x128xi32>
    %309 = arith.cmpi slt, %295, %308 : vector<1x128xi32>
    %310 = arith.andi %307, %309 : vector<1x128xi1>
    %cst_86 = arith.constant 0.000000e+00 : f32
    %311 = vector.broadcast %cst_86 : f32 to vector<64x128xf32>
    %cst_87 = arith.constant 0xFF800000 : f32
    %312 = vector.shape_cast %300 : vector<1x128xi1> to vector<1x128xi1>
    %313 = vector.broadcast %312 : vector<1x128xi1> to vector<64x128xi1>
    %314 = vector.broadcast %cst_87 : f32 to vector<64x128xf32>
    %315 = arith.select %313, %294, %314 : vector<64x128xi1>, vector<64x128xf32>
    %cst_88 = arith.constant dense<0xFF800000> : vector<64xf32>
    %316 = vector.multi_reduction <maximumf>, %315, %cst_88 [1] : vector<64x128xf32> to vector<64xf32>
    %317 = vector.shape_cast %316 : vector<64xf32> to vector<64x1xf32>
    %cst_89 = arith.constant 0.000000e+00 : f32
    %318 = vector.shape_cast %300 : vector<1x128xi1> to vector<1x128xi1>
    %319 = vector.broadcast %318 : vector<1x128xi1> to vector<64x128xi1>
    %320 = vector.shape_cast %317 : vector<64x1xf32> to vector<64x1xf32>
    %321 = vector.broadcast %320 : vector<64x1xf32> to vector<64x128xf32>
    %322 = vector.broadcast %cst_89 : f32 to vector<64x128xf32>
    %323 = arith.select %319, %321, %322 : vector<64x128xi1>, vector<64x128xf32>
    %324 = arith.addf %311, %323 : vector<64x128xf32>
    %cst_90 = arith.constant 0xFF800000 : f32
    %325 = vector.shape_cast %305 : vector<1x128xi1> to vector<1x128xi1>
    %326 = vector.broadcast %325 : vector<1x128xi1> to vector<64x128xi1>
    %327 = vector.broadcast %cst_90 : f32 to vector<64x128xf32>
    %328 = arith.select %326, %294, %327 : vector<64x128xi1>, vector<64x128xf32>
    %cst_91 = arith.constant dense<0xFF800000> : vector<64xf32>
    %329 = vector.multi_reduction <maximumf>, %328, %cst_91 [1] : vector<64x128xf32> to vector<64xf32>
    %330 = vector.shape_cast %329 : vector<64xf32> to vector<64x1xf32>
    %cst_92 = arith.constant 0.000000e+00 : f32
    %331 = vector.shape_cast %305 : vector<1x128xi1> to vector<1x128xi1>
    %332 = vector.broadcast %331 : vector<1x128xi1> to vector<64x128xi1>
    %333 = vector.shape_cast %330 : vector<64x1xf32> to vector<64x1xf32>
    %334 = vector.broadcast %333 : vector<64x1xf32> to vector<64x128xf32>
    %335 = vector.broadcast %cst_92 : f32 to vector<64x128xf32>
    %336 = arith.select %332, %334, %335 : vector<64x128xi1>, vector<64x128xf32>
    %337 = arith.addf %324, %336 : vector<64x128xf32>
    %cst_93 = arith.constant 0xFF800000 : f32
    %338 = vector.shape_cast %310 : vector<1x128xi1> to vector<1x128xi1>
    %339 = vector.broadcast %338 : vector<1x128xi1> to vector<64x128xi1>
    %340 = vector.broadcast %cst_93 : f32 to vector<64x128xf32>
    %341 = arith.select %339, %294, %340 : vector<64x128xi1>, vector<64x128xf32>
    %cst_94 = arith.constant dense<0xFF800000> : vector<64xf32>
    %342 = vector.multi_reduction <maximumf>, %341, %cst_94 [1] : vector<64x128xf32> to vector<64xf32>
    %343 = vector.shape_cast %342 : vector<64xf32> to vector<64x1xf32>
    %cst_95 = arith.constant 0.000000e+00 : f32
    %344 = vector.shape_cast %310 : vector<1x128xi1> to vector<1x128xi1>
    %345 = vector.broadcast %344 : vector<1x128xi1> to vector<64x128xi1>
    %346 = vector.shape_cast %343 : vector<64x1xf32> to vector<64x1xf32>
    %347 = vector.broadcast %346 : vector<64x1xf32> to vector<64x128xf32>
    %348 = vector.broadcast %cst_95 : f32 to vector<64x128xf32>
    %349 = arith.select %345, %347, %348 : vector<64x128xi1>, vector<64x128xf32>
    %350 = arith.addf %337, %349 : vector<64x128xf32>
    %351 = arith.subf %294, %350 : vector<64x128xf32>
    %352 = math.exp %351 : vector<64x128xf32>
    %cst_96 = arith.constant 0.000000e+00 : f32
    %353 = vector.broadcast %cst_96 : f32 to vector<64x128xf32>
    %cst_97 = arith.constant 0.000000e+00 : f32
    %354 = vector.shape_cast %300 : vector<1x128xi1> to vector<1x128xi1>
    %355 = vector.broadcast %354 : vector<1x128xi1> to vector<64x128xi1>
    %356 = vector.broadcast %cst_97 : f32 to vector<64x128xf32>
    %357 = arith.select %355, %352, %356 : vector<64x128xi1>, vector<64x128xf32>
    %cst_98 = arith.constant dense<0.000000e+00> : vector<64xf32>
    %358 = vector.multi_reduction <add>, %357, %cst_98 [1] : vector<64x128xf32> to vector<64xf32>
    %359 = vector.shape_cast %358 : vector<64xf32> to vector<64x1xf32>
    %cst_99 = arith.constant 0.000000e+00 : f32
    %360 = vector.shape_cast %300 : vector<1x128xi1> to vector<1x128xi1>
    %361 = vector.broadcast %360 : vector<1x128xi1> to vector<64x128xi1>
    %362 = vector.shape_cast %359 : vector<64x1xf32> to vector<64x1xf32>
    %363 = vector.broadcast %362 : vector<64x1xf32> to vector<64x128xf32>
    %364 = vector.broadcast %cst_99 : f32 to vector<64x128xf32>
    %365 = arith.select %361, %363, %364 : vector<64x128xi1>, vector<64x128xf32>
    %366 = arith.addf %353, %365 : vector<64x128xf32>
    %cst_100 = arith.constant 0.000000e+00 : f32
    %367 = vector.shape_cast %305 : vector<1x128xi1> to vector<1x128xi1>
    %368 = vector.broadcast %367 : vector<1x128xi1> to vector<64x128xi1>
    %369 = vector.broadcast %cst_100 : f32 to vector<64x128xf32>
    %370 = arith.select %368, %352, %369 : vector<64x128xi1>, vector<64x128xf32>
    %cst_101 = arith.constant dense<0.000000e+00> : vector<64xf32>
    %371 = vector.multi_reduction <add>, %370, %cst_101 [1] : vector<64x128xf32> to vector<64xf32>
    %372 = vector.shape_cast %371 : vector<64xf32> to vector<64x1xf32>
    %cst_102 = arith.constant 0.000000e+00 : f32
    %373 = vector.shape_cast %305 : vector<1x128xi1> to vector<1x128xi1>
    %374 = vector.broadcast %373 : vector<1x128xi1> to vector<64x128xi1>
    %375 = vector.shape_cast %372 : vector<64x1xf32> to vector<64x1xf32>
    %376 = vector.broadcast %375 : vector<64x1xf32> to vector<64x128xf32>
    %377 = vector.broadcast %cst_102 : f32 to vector<64x128xf32>
    %378 = arith.select %374, %376, %377 : vector<64x128xi1>, vector<64x128xf32>
    %379 = arith.addf %366, %378 : vector<64x128xf32>
    %cst_103 = arith.constant 0.000000e+00 : f32
    %380 = vector.shape_cast %310 : vector<1x128xi1> to vector<1x128xi1>
    %381 = vector.broadcast %380 : vector<1x128xi1> to vector<64x128xi1>
    %382 = vector.broadcast %cst_103 : f32 to vector<64x128xf32>
    %383 = arith.select %381, %352, %382 : vector<64x128xi1>, vector<64x128xf32>
    %cst_104 = arith.constant dense<0.000000e+00> : vector<64xf32>
    %384 = vector.multi_reduction <add>, %383, %cst_104 [1] : vector<64x128xf32> to vector<64xf32>
    %385 = vector.shape_cast %384 : vector<64xf32> to vector<64x1xf32>
    %cst_105 = arith.constant 0.000000e+00 : f32
    %386 = vector.shape_cast %310 : vector<1x128xi1> to vector<1x128xi1>
    %387 = vector.broadcast %386 : vector<1x128xi1> to vector<64x128xi1>
    %388 = vector.shape_cast %385 : vector<64x1xf32> to vector<64x1xf32>
    %389 = vector.broadcast %388 : vector<64x1xf32> to vector<64x128xf32>
    %390 = vector.broadcast %cst_105 : f32 to vector<64x128xf32>
    %391 = arith.select %387, %389, %390 : vector<64x128xi1>, vector<64x128xf32>
    %392 = arith.addf %379, %391 : vector<64x128xf32>
    %c12_i32_106 = arith.constant 12 : i32
    %393 = vector.broadcast %c12_i32_106 : i32 to vector<1x128xi32>
    %394 = arith.cmpi slt, %295, %393 : vector<1x128xi32>
    %cst_107 = arith.constant 1.000000e+00 : f32
    %395 = vector.shape_cast %394 : vector<1x128xi1> to vector<1x128xi1>
    %396 = vector.broadcast %395 : vector<1x128xi1> to vector<64x128xi1>
    %397 = vector.broadcast %cst_107 : f32 to vector<64x128xf32>
    %398 = arith.select %396, %392, %397 : vector<64x128xi1>, vector<64x128xf32>
    %399 = tpu.reciprocal %398 : vector<64x128xf32> -> vector<64x128xf32>
    %400 = arith.mulf %352, %399 : vector<64x128xf32>
    %cst_108 = arith.constant 0.000000e+00 : f32
    %401 = vector.shape_cast %394 : vector<1x128xi1> to vector<1x128xi1>
    %402 = vector.broadcast %401 : vector<1x128xi1> to vector<64x128xi1>
    %403 = vector.broadcast %cst_108 : f32 to vector<64x128xf32>
    %404 = arith.select %402, %400, %403 : vector<64x128xi1>, vector<64x128xf32>
    %405 = vector.shape_cast %404 : vector<64x128xf32> to vector<8x8x128xf32>
    %c0_109 = arith.constant 0 : index
    %c0_110 = arith.constant 0 : index
    %c0_111 = arith.constant 0 : index
    %406 = vector.load %arg9[%c0_109, %c0_110, %c0_111] : memref<8x8x128xf32, #tpu.memory_space<vmem>>, vector<8x8x128xf32>
    tpu.vector_store %arg9[%c0_109, %c0_110, %c0_111], %405 {strides = array<i32>} : memref<8x8x128xf32, #tpu.memory_space<vmem>>, vector<8x8x128xf32>,
    return
  }
  func.func @transform_0(%arg0: i32, %arg1: i32) -> (i32, i32, i32) {
    %c0_i32 = arith.constant 0 : i32
    %c0_i32_0 = arith.constant 0 : i32
    return %arg1, %arg0, %c0_i32 : i32, i32, i32
  }
  func.func @transform_1(%arg0: i32, %arg1: i32) -> (i32, i32) {
    %c0_i32 = arith.constant 0 : i32
    %c0_i32_0 = arith.constant 0 : i32
    %c0_i32_1 = arith.constant 0 : i32
    return %c0_i32, %c0_i32_0 : i32, i32
  }
  func.func @transform_2(%arg0: i32, %arg1: i32) -> (i32, i32) {
    %c0_i32 = arith.constant 0 : i32
    %c0_i32_0 = arith.constant 0 : i32
    %c0_i32_1 = arith.constant 0 : i32
    return %c0_i32, %c0_i32_0 : i32, i32
  }
  func.func @transform_3(%arg0: i32, %arg1: i32) -> (i32, i32) {
    %c0_i32 = arith.constant 0 : i32
    %c0_i32_0 = arith.constant 0 : i32
    %c0_i32_1 = arith.constant 0 : i32
    return %c0_i32, %c0_i32_0 : i32, i32
  }
  func.func @transform_4(%arg0: i32, %arg1: i32) -> (i32, i32) {
    %c0_i32 = arith.constant 0 : i32
    %c0_i32_0 = arith.constant 0 : i32
    %c0_i32_1 = arith.constant 0 : i32
    return %c0_i32, %c0_i32_0 : i32, i32
  }
  func.func @transform_5(%arg0: i32, %arg1: i32) -> (i32, i32) {
    %c0_i32 = arith.constant 0 : i32
    %c0_i32_0 = arith.constant 0 : i32
    %c0_i32_1 = arith.constant 0 : i32
    return %c0_i32, %c0_i32_0 : i32, i32
  }
  func.func @transform_6(%arg0: i32, %arg1: i32) -> (i32, i32) {
    %c0_i32 = arith.constant 0 : i32
    %c0_i32_0 = arith.constant 0 : i32
    %c0_i32_1 = arith.constant 0 : i32
    return %c0_i32, %c0_i32_0 : i32, i32
  }
  func.func @transform_7(%arg0: i32, %arg1: i32) -> (i32, i32, i32) {
    %c0_i32 = arith.constant 0 : i32
    %c0_i32_0 = arith.constant 0 : i32
    return %arg1, %arg0, %c0_i32 : i32, i32, i32
  }
}

</mosaic_0001>

<llo_original>
// kernel: tpu_custom_call.1
$region0: #{tpu_custom_call.1}
  #allocation0 [shape = 'u32[]', space=smem, size = 0x4, offset = 0x4, fixed_abs, tag = 'smem constant byte address 0x4 - core index']
  #allocation1 [shape = 'u32[144,128]{1,0:T(1,128)}', space=vmem, size = 0x12000, scoped, tag = 'internal scratch']
  #allocation2 [shape = 'f32[64,96]{1,0:T(8,128)}', space=vmem, size = 0x8000, scoped, tag = 'scratch operand']
  #allocation3 [shape = 'f32[64,32]{1,0:T(8,128)}', space=vmem, size = 0x8000, scoped, tag = 'scratch operand']
  #allocation4 [shape = 'f32[8,32]{1,0:T(8,128)}', space=vmem, size = 0x1000, scoped, tag = 'scratch operand']
  %s0 = inlined_call_operand.hbm [shape: f32[8,8,16], index: 0, kind: input, shape index: {}]
  %s1 = inlined_call_operand.hbm [shape: f32[16,96], index: 1, kind: input, shape index: {}]
  %s2 = inlined_call_operand.hbm [shape: f32[32,96], index: 2, kind: input, shape index: {}]
  %s3 = inlined_call_operand.vmem [shape: f32[1,96], index: 3, kind: input, shape index: {}]
  %s4 = inlined_call_operand.vmem [shape: f32[1,32], index: 4, kind: input, shape index: {}]
  %s5 = inlined_call_operand.hbm [shape: f32[32,128], index: 5, kind: input, shape index: {}]
  %s6 = inlined_call_operand.vmem [shape: f32[1,128], index: 6, kind: input, shape index: {}]
  %s7 = inlined_call_operand.hbm [shape: f32[8,8,128], index: 7, kind: output, shape index: {}]
  %s8 = sld [smem:[#allocation0]]
  $region58: #{tpu_custom_call.1} parent=0
    _
  %s10 = ssub.s32 1, %s8
  %s11 = scalar_select 0, %s10, %s8
  $region1: #{tpu_custom_call.1} parent=0
    #allocation5 [shape = 'u8[32768]{0}', space=vmem, size = 0x8000, scoped, tag = 'input window, operand 0, single buffered']
    #allocation6 [shape = 's32[1]{0}', space=sflag, size = 0x4, scoped, tag = 'scoped memory for tpu_custom_call.1']
    #allocation7 [shape = 's32[1]{0}', space=sflag, size = 0x4, scoped, tag = 'scoped memory for tpu_custom_call.1']
    #allocation8 [shape = 'u8[8192]{0}', space=vmem, size = 0x2000, scoped, tag = 'input window, operand 1, single buffered']
    #allocation9 [shape = 's32[1]{0}', space=sflag, size = 0x4, scoped, tag = 'scoped memory for tpu_custom_call.1']
    #allocation10 [shape = 'u8[16384]{0}', space=vmem, size = 0x4000, scoped, tag = 'input window, operand 2, single buffered']
    #allocation11 [shape = 'u8[16384]{0}', space=vmem, size = 0x4000, scoped, tag = 'input window, operand 5, single buffered']
    #allocation12 [shape = 's32[1]{0}', space=sflag, size = 0x4, scoped, tag = 'scoped memory for tpu_custom_call.1']
    #allocation13 [shape = 'u8[32768]{0}', space=vmem, size = 0x8000, scoped, tag = 'output window, operand 0, single buffered']
    %12 = vsyncpa [#allocation6], 0
    %13 = vsyncpa [#allocation9], 0
    %14 = vsyncpa [#allocation12], 0
    %15 = vsyncpa [#allocation7], 0
    // Predicated region
    $region2: #{tpu_custom_call.1} parent=1 // pred_check
      _
    $region3: #{tpu_custom_call.1} parent=1 // pred_check_branch
      %17 = sbr.rel (0) target = $region5
    $region4: #{tpu_custom_call.1} parent=1 // pred_region
      %s19 = ssub.s32 1024, 1024
      %20 = vsyncadd [#allocation6], %s19
      %s21 = sshll.u32 [#allocation5], 4
      %s22 = int_to_ptr.vmem [resolvable:$true] %s21
      %27 = dma.hbm_to_vmem [thread:$0]  %s0, 1024, %s22, [#allocation6], 128, 128, 8
    $region5: #{tpu_custom_call.1} parent=1 // pred_fallthru
      _
    // Predicated region
    $region6: #{tpu_custom_call.1} parent=1 // pred_check
      _
    $region7: #{tpu_custom_call.1} parent=1 // pred_check_branch
      %29 = sbr.rel (0) target = $region9
    $region8: #{tpu_custom_call.1} parent=1 // pred_region
      %s31 = ssub.s32 256, 256
      %32 = vsyncadd [#allocation9], %s31
      %s33 = sshll.u32 [#allocation8], 4
      %s34 = int_to_ptr.vmem [resolvable:$true] %s33
      %39 = dma.hbm_to_vmem [thread:$0]  %s1, 256, %s34, [#allocation9], 128, 128, 8
    $region9: #{tpu_custom_call.1} parent=1 // pred_fallthru
      _
    // Predicated region
    $region10: #{tpu_custom_call.1} parent=1 // pred_check
      _
    $region11: #{tpu_custom_call.1} parent=1 // pred_check_branch
      %41 = sbr.rel (0) target = $region13
    $region12: #{tpu_custom_call.1} parent=1 // pred_region
      %s43 = ssub.s32 512, 512
      %44 = vsyncadd [#allocation9], %s43
      %s45 = sshll.u32 [#allocation10], 4
      %s46 = int_to_ptr.vmem [resolvable:$true] %s45
      %51 = dma.hbm_to_vmem [thread:$0]  %s2, 512, %s46, [#allocation9], 128, 128, 8
    $region13: #{tpu_custom_call.1} parent=1 // pred_fallthru
      _
    // Predicated region
    $region14: #{tpu_custom_call.1} parent=1 // pred_check
      _
    $region15: #{tpu_custom_call.1} parent=1 // pred_check_branch
      %53 = sbr.rel (0) target = $region17
    $region16: #{tpu_custom_call.1} parent=1 // pred_region
      _
    $region17: #{tpu_custom_call.1} parent=1 // pred_fallthru
      _
    // Predicated region
    $region18: #{tpu_custom_call.1} parent=1 // pred_check
      _
    $region19: #{tpu_custom_call.1} parent=1 // pred_check_branch
      %55 = sbr.rel (0) target = $region21
    $region20: #{tpu_custom_call.1} parent=1 // pred_region
      _
    $region21: #{tpu_custom_call.1} parent=1 // pred_fallthru
      _
    // Predicated region
    $region22: #{tpu_custom_call.1} parent=1 // pred_check
      _
    $region23: #{tpu_custom_call.1} parent=1 // pred_check_branch
      %57 = sbr.rel (0) target = $region25
    $region24: #{tpu_custom_call.1} parent=1 // pred_region
      %s59 = ssub.s32 512, 512
      %60 = vsyncadd [#allocation12], %s59
      %s61 = sshll.u32 [#allocation11], 4
      %s62 = int_to_ptr.vmem [resolvable:$true] %s61
      %67 = dma.hbm_to_vmem [thread:$0]  %s5, 512, %s62, [#allocation12], 128, 128, 8
    $region25: #{tpu_custom_call.1} parent=1 // pred_fallthru
      _
    // Predicated region
    $region26: #{tpu_custom_call.1} parent=1 // pred_check
      _
    $region27: #{tpu_custom_call.1} parent=1 // pred_check_branch
      %69 = sbr.rel (0) target = $region29
    $region28: #{tpu_custom_call.1} parent=1 // pred_region
      _
    $region29: #{tpu_custom_call.1} parent=1 // pred_fallthru
      _
    // Predicated region
    $region30: #{tpu_custom_call.1} parent=1 // pred_check
      _
    $region31: #{tpu_custom_call.1} parent=1 // pred_check_branch
      %71 = sbr.rel (0) target = $region33
    $region32: #{tpu_custom_call.1} parent=1 // pred_region
      %72 = dma.done [#allocation6], 1024
    $region33: #{tpu_custom_call.1} parent=1 // pred_fallthru
      _
    // Predicated region
    $region34: #{tpu_custom_call.1} parent=1 // pred_check
      _
    $region35: #{tpu_custom_call.1} parent=1 // pred_check_branch
      %74 = sbr.rel (0) target = $region37
    $region36: #{tpu_custom_call.1} parent=1 // pred_region
      %75 = dma.done [#allocation9], 256
    $region37: #{tpu_custom_call.1} parent=1 // pred_fallthru
      _
    // Predicated region
    $region38: #{tpu_custom_call.1} parent=1 // pred_check
      _
    $region39: #{tpu_custom_call.1} parent=1 // pred_check_branch
      %77 = sbr.rel (0) target = $region41
    $region40: #{tpu_custom_call.1} parent=1 // pred_region
      %78 = dma.done [#allocation9], 512
    $region41: #{tpu_custom_call.1} parent=1 // pred_fallthru
      _
    // Predicated region
    $region42: #{tpu_custom_call.1} parent=1 // pred_check
      _
    $region43: #{tpu_custom_call.1} parent=1 // pred_check_branch
      %80 = sbr.rel (0) target = $region45
    $region44: #{tpu_custom_call.1} parent=1 // pred_region
      %81 = dma.done [#allocation12], 512
    $region45: #{tpu_custom_call.1} parent=1 // pred_fallthru
      _
    %p82 = scmp.eq.s32.totalorder 0, 0
    // Predicated region
    $region46: #{tpu_custom_call.1} parent=1 // pred_check
      %p83 = pneg %p82
    $region47: #{tpu_custom_call.1} parent=1 // pred_check_branch
      %85 = sbr.rel (%p83) target = $region49
    $region48: #{tpu_custom_call.1} parent=1 // pred_region
      %vm86 = vcmask 261120
      %87 = vst.msk [vmem:[#allocation4] sm:$0xff] %vm86, 0.0
    $region49: #{tpu_custom_call.1} parent=1 // pred_fallthru
      _
    %v88 = vld [vmem:[#allocation5] sm:$0xff]
    %v89 = vld [vmem:[#allocation5 + $0x8] sm:$0xff]
    %v90 = vld [vmem:[#allocation5 + $0x10] sm:$0xff]
    %v91 = vld [vmem:[#allocation5 + $0x18] sm:$0xff]
    %v92 = vld [vmem:[#allocation5 + $0x20] sm:$0xff]
    %v93 = vld [vmem:[#allocation5 + $0x28] sm:$0xff]
    %v94 = vld [vmem:[#allocation5 + $0x30] sm:$0xff]
    %v95 = vld [vmem:[#allocation5 + $0x38] sm:$0xff]
    %v96 = vld [vmem:[#allocation8] sm:$0xff]
    %v97 = vld [vmem:[#allocation8 + $0x8] sm:$0xff]
    %v98 = vld [vmem:[%s3] sm:$0x1]
    %v100 = vlaneseq
    %v101 = vshrl.u32 %v100, 7
    %v102 = vsub.s32 0, %v101
    %v103 = vrot.slane %v98, %v102
    %vm105 = vcmask 130048
    %v107 = vsel %vm105, %v88, 0
    %v110 = vsel %vm105, %v89, 0
    %v113 = vsel %vm105, %v90, 0
    %v116 = vsel %vm105, %v91, 0
    %v119 = vsel %vm105, %v92, 0
    %v122 = vsel %vm105, %v93, 0
    %v125 = vsel %vm105, %v94, 0
    %v128 = vsel %vm105, %v95, 0
    %130 = vmatprep.subr.mxu0 0.0
    %131 = vmatpush1.msra.mxu0 0.0
    %132 = vmatprep.subr.mxu0 0.0
    %133 = vmatpush1.msra.mxu0 0.0
    %134 = vmatprep.subr.mxu0 0.0
    %135 = vmatpush1.msra.mxu0 0.0
    %136 = vmatprep.subr.mxu0 0.0
    %137 = vmatpush1.msra.mxu0 0.0
    %138 = vmatprep.subr.mxu0 0.0
    %139 = vmatpush1.msra.mxu0 0.0
    %140 = vmatprep.subr.mxu0 0.0
    %141 = vmatpush1.msra.mxu0 0.0
    %142 = vmatprep.subr.mxu0 0.0
    %143 = vmatpush1.msra.mxu0 0.0
    %144 = vmatprep.subr.mxu0 0.0
    %145 = vmatpush1.msra.mxu0 0.0
    %146 = vmatprep.subr.mxu0 0.0
    %147 = vmatpush1.msra.mxu0 0.0
    %148 = vmatprep.subr.mxu0 0.0
    %149 = vmatpush1.msra.mxu0 0.0
    %150 = vmatprep.subr.mxu0 0.0
    %151 = vmatpush1.msra.mxu0 0.0
    %152 = vmatprep.subr.mxu0 0.0
    %153 = vmatpush1.msra.mxu0 0.0
    %154 = vmatprep.subr.mxu0 0.0
    %155 = vmatpush1.msra.mxu0 0.0
    %156 = vmatprep.subr.mxu0 0.0
    %157 = vmatpush1.msra.mxu0 0.0
    %158 = vmatprep.subr.mxu0 0.0
    %159 = vmatpush1.msra.mxu0 %v97
    %160 = vmatprep.subr.mxu0 0.0
    %161 = vmatpush1.msra.mxu0 %v96
    %162 = vmatprep.subr.mxu0 0.0
    %163 = vmatpush2.msra.mxu0 0.0
    %164 = vmatprep.subr.mxu0 0.0
    %165 = vmatpush2.msra.mxu0 0.0
    %166 = vmatprep.subr.mxu0 0.0
    %167 = vmatpush2.msra.mxu0 0.0
    %168 = vmatprep.subr.mxu0 0.0
    %169 = vmatpush2.msra.mxu0 0.0
    %170 = vmatprep.subr.mxu0 0.0
    %171 = vmatpush2.msra.mxu0 0.0
    %172 = vmatprep.subr.mxu0 0.0
    %173 = vmatpush2.msra.mxu0 0.0
    %174 = vmatprep.subr.mxu0 0.0
    %175 = vmatpush2.msra.mxu0 0.0
    %176 = vmatprep.subr.mxu0 0.0
    %177 = vmatpush2.msra.mxu0 0.0
    %178 = vmatprep.subr.mxu0 0.0
    %179 = vmatpush2.msra.mxu0 0.0
    %180 = vmatprep.subr.mxu0 0.0
    %181 = vmatpush2.msra.mxu0 0.0
    %182 = vmatprep.subr.mxu0 0.0
    %183 = vmatpush2.msra.mxu0 0.0
    %184 = vmatprep.subr.mxu0 0.0
    %185 = vmatpush2.msra.mxu0 0.0
    %186 = vmatprep.subr.mxu0 0.0
    %187 = vmatpush2.msra.mxu0 0.0
    %188 = vmatprep.subr.mxu0 0.0
    %189 = vmatpush2.msra.mxu0 0.0
    %190 = vmatprep.subr.mxu0 0.0
    %191 = vmatpush2.msra.mxu0 0.0
    %192 = vmatprep.subr.mxu0 0.0
    %193 = vmatpush2.msra.mxu0 0.0
    %194 = vmatprep.mubr.f32.mxu0 0.0
    %195 = vmatmul.mubr.f32.gmra.mxu0 %v107
    %v196 = vpop.f32.mrf.mxu0
    %v197 = vadd.f32 %v103, %v196
    %v198 = vpop.f32.mrf.mxu0
    %199 = vmatprep.mubr.f32.mxu0 0.0
    %200 = vmatmul.mubr.f32.gmra.mxu0 %v110
    %v201 = vpop.f32.mrf.mxu0
    %v202 = vadd.f32 %v103, %v201
    %v203 = vpop.f32.mrf.mxu0
    %204 = vmatprep.mubr.f32.mxu0 0.0
    %205 = vmatmul.mubr.f32.gmra.mxu0 %v113
    %v206 = vpop.f32.mrf.mxu0
    %v207 = vadd.f32 %v103, %v206
    %v208 = vpop.f32.mrf.mxu0
    %209 = vmatprep.mubr.f32.mxu0 0.0
    %210 = vmatmul.mubr.f32.gmra.mxu0 %v116
    %v211 = vpop.f32.mrf.mxu0
    %v212 = vadd.f32 %v103, %v211
    %v213 = vpop.f32.mrf.mxu0
    %214 = vmatprep.mubr.f32.mxu0 0.0
    %215 = vmatmul.mubr.f32.gmra.mxu0 %v119
    %v216 = vpop.f32.mrf.mxu0
    %v217 = vadd.f32 %v103, %v216
    %v218 = vpop.f32.mrf.mxu0
    %219 = vmatprep.mubr.f32.mxu0 0.0
    %220 = vmatmul.mubr.f32.gmra.mxu0 %v122
    %v221 = vpop.f32.mrf.mxu0
    %v222 = vadd.f32 %v103, %v221
    %v223 = vpop.f32.mrf.mxu0
    %224 = vmatprep.mubr.f32.mxu0 0.0
    %225 = vmatmul.mubr.f32.gmra.mxu0 %v125
    %v226 = vpop.f32.mrf.mxu0
    %v227 = vadd.f32 %v103, %v226
    %v228 = vpop.f32.mrf.mxu0
    %229 = vmatprep.mubr.f32.mxu0 0.0
    %230 = vmatmul.mubr.f32.gmra.mxu0 %v128
    %v231 = vpop.f32.mrf.mxu0
    %v232 = vadd.f32 %v103, %v231
    %v233 = vpop.f32.mrf.mxu0
    %234 = vdwg.mxu0
    %vm235 = vcmask 785408
    %236 = vst.msk [vmem:[#allocation2] sm:$0xff] %vm235, %v197
    %237 = vst.msk [vmem:[#allocation2 + $0x8] sm:$0xff] %vm235, %v202
    %238 = vst.msk [vmem:[#allocation2 + $0x10] sm:$0xff] %vm235, %v207
    %239 = vst.msk [vmem:[#allocation2 + $0x18] sm:$0xff] %vm235, %v212
    %240 = vst.msk [vmem:[#allocation2 + $0x20] sm:$0xff] %vm235, %v217
    %241 = vst.msk [vmem:[#allocation2 + $0x28] sm:$0xff] %vm235, %v222
    %242 = vst.msk [vmem:[#allocation2 + $0x30] sm:$0xff] %vm235, %v227
    %243 = vst.msk [vmem:[#allocation2 + $0x38] sm:$0xff] %vm235, %v232
    %v244 = vld [vmem:[#allocation10] sm:$0xff]
    %v245 = vld [vmem:[#allocation10 + $0x8] sm:$0xff]
    %v246 = vld [vmem:[#allocation10 + $0x10] sm:$0xff]
    %v247 = vld [vmem:[#allocation10 + $0x18] sm:$0xff]
    %v248 = vld [vmem:[%s4] sm:$0x1]
    %v250 = vlaneseq
    %v251 = vshrl.u32 %v250, 7
    %v252 = vsub.s32 0, %v251
    %v253 = vrot.slane %v248, %v252
    %v254 = vld [vmem:[#allocation4] sm:$0xff]
    %v255 = vld [vmem:[#allocation2] sm:$0xff]
    %vm256 = vcmask 261120
    %v258 = vsel %vm256, %v254, 0
    %260 = vmatprep.subr.mxu0 0.0
    %261 = vmatpush1.msra.mxu0 0.0
    %262 = vmatprep.subr.mxu0 0.0
    %263 = vmatpush1.msra.mxu0 0.0
    %264 = vmatprep.subr.mxu0 0.0
    %265 = vmatpush1.msra.mxu0 0.0
    %266 = vmatprep.subr.mxu0 0.0
    %267 = vmatpush1.msra.mxu0 0.0
    %268 = vmatprep.subr.mxu0 0.0
    %269 = vmatpush1.msra.mxu0 0.0
    %270 = vmatprep.subr.mxu0 0.0
    %271 = vmatpush1.msra.mxu0 0.0
    %272 = vmatprep.subr.mxu0 0.0
    %273 = vmatpush1.msra.mxu0 0.0
    %274 = vmatprep.subr.mxu0 0.0
    %275 = vmatpush1.msra.mxu0 0.0
    %276 = vmatprep.subr.mxu0 0.0
    %277 = vmatpush1.msra.mxu0 0.0
    %278 = vmatprep.subr.mxu0 0.0
    %279 = vmatpush1.msra.mxu0 0.0
    %280 = vmatprep.subr.mxu0 0.0
    %281 = vmatpush1.msra.mxu0 0.0
    %282 = vmatprep.subr.mxu0 0.0
    %283 = vmatpush1.msra.mxu0 0.0
    %284 = vmatprep.subr.mxu0 0.0
    %285 = vmatpush1.msra.mxu0 %v247
    %286 = vmatprep.subr.mxu0 0.0
    %287 = vmatpush1.msra.mxu0 %v246
    %288 = vmatprep.subr.mxu0 0.0
    %289 = vmatpush1.msra.mxu0 %v245
    %290 = vmatprep.subr.mxu0 0.0
    %291 = vmatpush1.msra.mxu0 %v244
    %292 = vmatprep.subr.mxu0 0.0
    %293 = vmatpush2.msra.mxu0 0.0
    %294 = vmatprep.subr.mxu0 0.0
    %295 = vmatpush2.msra.mxu0 0.0
    %296 = vmatprep.subr.mxu0 0.0
    %297 = vmatpush2.msra.mxu0 0.0
    %298 = vmatprep.subr.mxu0 0.0
    %299 = vmatpush2.msra.mxu0 0.0
    %300 = vmatprep.subr.mxu0 0.0
    %301 = vmatpush2.msra.mxu0 0.0
    %302 = vmatprep.subr.mxu0 0.0
    %303 = vmatpush2.msra.mxu0 0.0
    %304 = vmatprep.subr.mxu0 0.0
    %305 = vmatpush2.msra.mxu0 0.0
    %306 = vmatprep.subr.mxu0 0.0
    %307 = vmatpush2.msra.mxu0 0.0
    %308 = vmatprep.subr.mxu0 0.0
    %309 = vmatpush2.msra.mxu0 0.0
    %310 = vmatprep.subr.mxu0 0.0
    %311 = vmatpush2.msra.mxu0 0.0
    %312 = vmatprep.subr.mxu0 0.0
    %313 = vmatpush2.msra.mxu0 0.0
    %314 = vmatprep.subr.mxu0 0.0
    %315 = vmatpush2.msra.mxu0 0.0
    %316 = vmatprep.subr.mxu0 0.0
    %317 = vmatpush2.msra.mxu0 0.0
    %318 = vmatprep.subr.mxu0 0.0
    %319 = vmatpush2.msra.mxu0 0.0
    %320 = vmatprep.subr.mxu0 0.0
    %321 = vmatpush2.msra.mxu0 0.0
    %322 = vmatprep.subr.mxu0 0.0
    %323 = vmatpush2.msra.mxu0 0.0
    %324 = vmatprep.mubr.f32.mxu0 0.0
    %325 = vmatmul.mubr.f32.gmra.mxu0 %v258
    %v326 = vpop.f32.mrf.mxu0
    %v327 = vadd.f32 0.0, %v326
    %v328 = vpop.f32.mrf.mxu0
    %329 = vdwg.mxu0
    %v330 = vadd.f32 %v255, %v327
    %v331 = vxor.u32 %v330, 2147483648
    %v332 = vmul.f32 %v331, 1.442695
    %v333 = vpow.pop %v332
    %v334 = vadd.f32 %v333, 1.0
    %v335 = vrcp.pop %v334
    %v336 = vmul.f32 1.0, %v335
    %337 = vrot.lane.b32.xlu0 %v253, 64
    %v338 = vpop.permute.xlu0 %337
    %v340 = vadd.f32 %v327, %v338
    %342 = vrot.lane.b32.xlu0 %v340, 64
    %v343 = vpop.permute.xlu0 %342
    %v345 = vmul.f32 %v336, %v343
    %347 = vrot.lane.b32.xlu0 %v345, 64
    %v348 = vpop.permute.xlu0 %347
    %v350 = vadd.f32 %v255, %v348
    %v351 = vtanh.pop %v350
    %v352 = vsub.f32 1.0, %v336
    %354 = vrot.lane.b32.xlu0 %v351, 96
    %v355 = vpop.permute.xlu0 %354
    %v357 = vmul.f32 %v352, %v355
    %358 = vrot.lane.b32.xlu0 %v254, 32
    %v359 = vpop.permute.xlu0 %358
    %v361 = vmul.f32 %v336, %v359
    %v362 = vadd.f32 %v357, %v361
    %364 = vrot.lane.b32.xlu0 %v362, 96
    %v365 = vpop.permute.xlu0 %364
    %367 = vst.msk [vmem:[#allocation3] sm:$0xff] %vm256, %v365
    %s368 = scalar_lea.vmem [#allocation2], 8
    %v369 = vld [vmem:[%s368] sm:$0xff]
    %v370 = vsel %vm256, %v365, 0
    %372 = vmatprep.subr.mxu0 0.0
    %373 = vmatpush1.msra.mxu0 0.0
    %374 = vmatprep.subr.mxu0 0.0
    %375 = vmatpush1.msra.mxu0 0.0
    %376 = vmatprep.subr.mxu0 0.0
    %377 = vmatpush1.msra.mxu0 0.0
    %378 = vmatprep.subr.mxu0 0.0
    %379 = vmatpush1.msra.mxu0 0.0
    %380 = vmatprep.subr.mxu0 0.0
    %381 = vmatpush1.msra.mxu0 0.0
    %382 = vmatprep.subr.mxu0 0.0
    %383 = vmatpush1.msra.mxu0 0.0
    %384 = vmatprep.subr.mxu0 0.0
    %385 = vmatpush1.msra.mxu0 0.0
    %386 = vmatprep.subr.mxu0 0.0
    %387 = vmatpush1.msra.mxu0 0.0
    %388 = vmatprep.subr.mxu0 0.0
    %389 = vmatpush1.msra.mxu0 0.0
    %390 = vmatprep.subr.mxu0 0.0
    %391 = vmatpush1.msra.mxu0 0.0
    %392 = vmatprep.subr.mxu0 0.0
    %393 = vmatpush1.msra.mxu0 0.0
    %394 = vmatprep.subr.mxu0 0.0
    %395 = vmatpush1.msra.mxu0 0.0
    %396 = vmatprep.subr.mxu0 0.0
    %397 = vmatpush1.msra.mxu0 %v247
    %398 = vmatprep.subr.mxu0 0.0
    %399 = vmatpush1.msra.mxu0 %v246
    %400 = vmatprep.subr.mxu0 0.0
    %401 = vmatpush1.msra.mxu0 %v245
    %402 = vmatprep.subr.mxu0 0.0
    %403 = vmatpush1.msra.mxu0 %v244
    %404 = vmatprep.subr.mxu0 0.0
    %405 = vmatpush2.msra.mxu0 0.0
    %406 = vmatprep.subr.mxu0 0.0
    %407 = vmatpush2.msra.mxu0 0.0
    %408 = vmatprep.subr.mxu0 0.0
    %409 = vmatpush2.msra.mxu0 0.0
    %410 = vmatprep.subr.mxu0 0.0
    %411 = vmatpush2.msra.mxu0 0.0
    %412 = vmatprep.subr.mxu0 0.0
    %413 = vmatpush2.msra.mxu0 0.0
    %414 = vmatprep.subr.mxu0 0.0
    %415 = vmatpush2.msra.mxu0 0.0
    %416 = vmatprep.subr.mxu0 0.0
    %417 = vmatpush2.msra.mxu0 0.0
    %418 = vmatprep.subr.mxu0 0.0
    %419 = vmatpush2.msra.mxu0 0.0
    %420 = vmatprep.subr.mxu0 0.0
    %421 = vmatpush2.msra.mxu0 0.0
    %422 = vmatprep.subr.mxu0 0.0
    %423 = vmatpush2.msra.mxu0 0.0
    %424 = vmatprep.subr.mxu0 0.0
    %425 = vmatpush2.msra.mxu0 0.0
    %426 = vmatprep.subr.mxu0 0.0
    %427 = vmatpush2.msra.mxu0 0.0
    %428 = vmatprep.subr.mxu0 0.0
    %429 = vmatpush2.msra.mxu0 0.0
    %430 = vmatprep.subr.mxu0 0.0
    %431 = vmatpush2.msra.mxu0 0.0
    %432 = vmatprep.subr.mxu0 0.0
    %433 = vmatpush2.msra.mxu0 0.0
    %434 = vmatprep.subr.mxu0 0.0
    %435 = vmatpush2.msra.mxu0 0.0
    %436 = vmatprep.mubr.f32.mxu0 0.0
    %437 = vmatmul.mubr.f32.gmra.mxu0 %v370
    %v438 = vpop.f32.mrf.mxu0
    %v439 = vadd.f32 0.0, %v438
    %v440 = vpop.f32.mrf.mxu0
    %441 = vdwg.mxu0
    %v442 = vadd.f32 %v369, %v439
    %v443 = vxor.u32 %v442, 2147483648
    %v444 = vmul.f32 %v443, 1.442695
    %v445 = vpow.pop %v444
    %v446 = vadd.f32 %v445, 1.0
    %v447 = vrcp.pop %v446
    %v448 = vmul.f32 1.0, %v447
    %v449 = vadd.f32 %v439, %v338
    %451 = vrot.lane.b32.xlu0 %v449, 64
    %v452 = vpop.permute.xlu0 %451
    %v454 = vmul.f32 %v448, %v452
    %456 = vrot.lane.b32.xlu0 %v454, 64
    %v457 = vpop.permute.xlu0 %456
    %v459 = vadd.f32 %v369, %v457
    %v460 = vtanh.pop %v459
    %v461 = vsub.f32 1.0, %v448
    %463 = vrot.lane.b32.xlu0 %v460, 96
    %v464 = vpop.permute.xlu0 %463
    %v466 = vmul.f32 %v461, %v464
    %v467 = vmul.f32 %v448, %v362
    %v468 = vadd.f32 %v466, %v467
    %470 = vrot.lane.b32.xlu0 %v468, 96
    %v471 = vpop.permute.xlu0 %470
    %s473 = scalar_lea.vmem [#allocation3], 8
    %474 = vst.msk [vmem:[%s473] sm:$0xff] %vm256, %v471
    %s475 = scalar_lea.vmem [#allocation2], 16
    %v476 = vld [vmem:[%s475] sm:$0xff]
    %v477 = vsel %vm256, %v471, 0
    %479 = vmatprep.subr.mxu0 0.0
    %480 = vmatpush1.msra.mxu0 0.0
    %481 = vmatprep.subr.mxu0 0.0
    %482 = vmatpush1.msra.mxu0 0.0
    %483 = vmatprep.subr.mxu0 0.0
    %484 = vmatpush1.msra.mxu0 0.0
    %485 = vmatprep.subr.mxu0 0.0
    %486 = vmatpush1.msra.mxu0 0.0
    %487 = vmatprep.subr.mxu0 0.0
    %488 = vmatpush1.msra.mxu0 0.0
    %489 = vmatprep.subr.mxu0 0.0
    %490 = vmatpush1.msra.mxu0 0.0
    %491 = vmatprep.subr.mxu0 0.0
    %492 = vmatpush1.msra.mxu0 0.0
    %493 = vmatprep.subr.mxu0 0.0
    %494 = vmatpush1.msra.mxu0 0.0
    %495 = vmatprep.subr.mxu0 0.0
    %496 = vmatpush1.msra.mxu0 0.0
    %497 = vmatprep.subr.mxu0 0.0
    %498 = vmatpush1.msra.mxu0 0.0
    %499 = vmatprep.subr.mxu0 0.0
    %500 = vmatpush1.msra.mxu0 0.0
    %501 = vmatprep.subr.mxu0 0.0
    %502 = vmatpush1.msra.mxu0 0.0
    %503 = vmatprep.subr.mxu0 0.0
    %504 = vmatpush1.msra.mxu0 %v247
    %505 = vmatprep.subr.mxu0 0.0
    %506 = vmatpush1.msra.mxu0 %v246
    %507 = vmatprep.subr.mxu0 0.0
    %508 = vmatpush1.msra.mxu0 %v245
    %509 = vmatprep.subr.mxu0 0.0
    %510 = vmatpush1.msra.mxu0 %v244
    %511 = vmatprep.subr.mxu0 0.0
    %512 = vmatpush2.msra.mxu0 0.0
    %513 = vmatprep.subr.mxu0 0.0
    %514 = vmatpush2.msra.mxu0 0.0
    %515 = vmatprep.subr.mxu0 0.0
    %516 = vmatpush2.msra.mxu0 0.0
    %517 = vmatprep.subr.mxu0 0.0
    %518 = vmatpush2.msra.mxu0 0.0
    %519 = vmatprep.subr.mxu0 0.0
    %520 = vmatpush2.msra.mxu0 0.0
    %521 = vmatprep.subr.mxu0 0.0
    %522 = vmatpush2.msra.mxu0 0.0
    %523 = vmatprep.subr.mxu0 0.0
    %524 = vmatpush2.msra.mxu0 0.0
    %525 = vmatprep.subr.mxu0 0.0
    %526 = vmatpush2.msra.mxu0 0.0
    %527 = vmatprep.subr.mxu0 0.0
    %528 = vmatpush2.msra.mxu0 0.0
    %529 = vmatprep.subr.mxu0 0.0
    %530 = vmatpush2.msra.mxu0 0.0
    %531 = vmatprep.subr.mxu0 0.0
    %532 = vmatpush2.msra.mxu0 0.0
    %533 = vmatprep.subr.mxu0 0.0
    %534 = vmatpush2.msra.mxu0 0.0
    %535 = vmatprep.subr.mxu0 0.0
    %536 = vmatpush2.msra.mxu0 0.0
    %537 = vmatprep.subr.mxu0 0.0
    %538 = vmatpush2.msra.mxu0 0.0
    %539 = vmatprep.subr.mxu0 0.0
    %540 = vmatpush2.msra.mxu0 0.0
    %541 = vmatprep.subr.mxu0 0.0
    %542 = vmatpush2.msra.mxu0 0.0
    %543 = vmatprep.mubr.f32.mxu0 0.0
    %544 = vmatmul.mubr.f32.gmra.mxu0 %v477
    %v545 = vpop.f32.mrf.mxu0
    %v546 = vadd.f32 0.0, %v545
    %v547 = vpop.f32.mrf.mxu0
    %548 = vdwg.mxu0
    %v549 = vadd.f32 %v476, %v546
    %v550 = vxor.u32 %v549, 2147483648
    %v551 = vmul.f32 %v550, 1.442695
    %v552 = vpow.pop %v551
    %v553 = vadd.f32 %v552, 1.0
    %v554 = vrcp.pop %v553
    %v555 = vmul.f32 1.0, %v554
    %v556 = vadd.f32 %v546, %v338
    %558 = vrot.lane.b32.xlu0 %v556, 64
    %v559 = vpop.permute.xlu0 %558
    %v561 = vmul.f32 %v555, %v559
    %563 = vrot.lane.b32.xlu0 %v561, 64
    %v564 = vpop.permute.xlu0 %563
    %v566 = vadd.f32 %v476, %v564
    %v567 = vtanh.pop %v566
    %v568 = vsub.f32 1.0, %v555
    %570 = vrot.lane.b32.xlu0 %v567, 96
    %v571 = vpop.permute.xlu0 %570
    %v573 = vmul.f32 %v568, %v571
    %v574 = vmul.f32 %v555, %v468
    %v575 = vadd.f32 %v573, %v574
    %577 = vrot.lane.b32.xlu0 %v575, 96
    %v578 = vpop.permute.xlu0 %577
    %s580 = scalar_lea.vmem [#allocation3], 16
    %581 = vst.msk [vmem:[%s580] sm:$0xff] %vm256, %v578
    %s582 = scalar_lea.vmem [#allocation2], 24
    %v583 = vld [vmem:[%s582] sm:$0xff]
    %v584 = vsel %vm256, %v578, 0
    %586 = vmatprep.subr.mxu0 0.0
    %587 = vmatpush1.msra.mxu0 0.0
    %588 = vmatprep.subr.mxu0 0.0
    %589 = vmatpush1.msra.mxu0 0.0
    %590 = vmatprep.subr.mxu0 0.0
    %591 = vmatpush1.msra.mxu0 0.0
    %592 = vmatprep.subr.mxu0 0.0
    %593 = vmatpush1.msra.mxu0 0.0
    %594 = vmatprep.subr.mxu0 0.0
    %595 = vmatpush1.msra.mxu0 0.0
    %596 = vmatprep.subr.mxu0 0.0
    %597 = vmatpush1.msra.mxu0 0.0
    %598 = vmatprep.subr.mxu0 0.0
    %599 = vmatpush1.msra.mxu0 0.0
    %600 = vmatprep.subr.mxu0 0.0
    %601 = vmatpush1.msra.mxu0 0.0
    %602 = vmatprep.subr.mxu0 0.0
    %603 = vmatpush1.msra.mxu0 0.0
    %604 = vmatprep.subr.mxu0 0.0
    %605 = vmatpush1.msra.mxu0 0.0
    %606 = vmatprep.subr.mxu0 0.0
    %607 = vmatpush1.msra.mxu0 0.0
    %608 = vmatprep.subr.mxu0 0.0
    %609 = vmatpush1.msra.mxu0 0.0
    %610 = vmatprep.subr.mxu0 0.0
    %611 = vmatpush1.msra.mxu0 %v247
    %612 = vmatprep.subr.mxu0 0.0
    %613 = vmatpush1.msra.mxu0 %v246
    %614 = vmatprep.subr.mxu0 0.0
    %615 = vmatpush1.msra.mxu0 %v245
    %616 = vmatprep.subr.mxu0 0.0
    %617 = vmatpush1.msra.mxu0 %v244
    %618 = vmatprep.subr.mxu0 0.0
    %619 = vmatpush2.msra.mxu0 0.0
    %620 = vmatprep.subr.mxu0 0.0
    %621 = vmatpush2.msra.mxu0 0.0
    %622 = vmatprep.subr.mxu0 0.0
    %623 = vmatpush2.msra.mxu0 0.0
    %624 = vmatprep.subr.mxu0 0.0
    %625 = vmatpush2.msra.mxu0 0.0
    %626 = vmatprep.subr.mxu0 0.0
    %627 = vmatpush2.msra.mxu0 0.0
    %628 = vmatprep.subr.mxu0 0.0
    %629 = vmatpush2.msra.mxu0 0.0
    %630 = vmatprep.subr.mxu0 0.0
    %631 = vmatpush2.msra.mxu0 0.0
    %632 = vmatprep.subr.mxu0 0.0
    %633 = vmatpush2.msra.mxu0 0.0
    %634 = vmatprep.subr.mxu0 0.0
    %635 = vmatpush2.msra.mxu0 0.0
    %636 = vmatprep.subr.mxu0 0.0
    %637 = vmatpush2.msra.mxu0 0.0
    %638 = vmatprep.subr.mxu0 0.0
    %639 = vmatpush2.msra.mxu0 0.0
    %640 = vmatprep.subr.mxu0 0.0
    %641 = vmatpush2.msra.mxu0 0.0
    %642 = vmatprep.subr.mxu0 0.0
    %643 = vmatpush2.msra.mxu0 0.0
    %644 = vmatprep.subr.mxu0 0.0
    %645 = vmatpush2.msra.mxu0 0.0
    %646 = vmatprep.subr.mxu0 0.0
    %647 = vmatpush2.msra.mxu0 0.0
    %648 = vmatprep.subr.mxu0 0.0
    %649 = vmatpush2.msra.mxu0 0.0
    %650 = vmatprep.mubr.f32.mxu0 0.0
    %651 = vmatmul.mubr.f32.gmra.mxu0 %v584
    %v652 = vpop.f32.mrf.mxu0
    %v653 = vadd.f32 0.0, %v652
    %v654 = vpop.f32.mrf.mxu0
    %655 = vdwg.mxu0
    %v656 = vadd.f32 %v583, %v653
    %v657 = vxor.u32 %v656, 2147483648
    %v658 = vmul.f32 %v657, 1.442695
    %v659 = vpow.pop %v658
    %v660 = vadd.f32 %v659, 1.0
    %v661 = vrcp.pop %v660
    %v662 = vmul.f32 1.0, %v661
    %v663 = vadd.f32 %v653, %v338
    %665 = vrot.lane.b32.xlu0 %v663, 64
    %v666 = vpop.permute.xlu0 %665
    %v668 = vmul.f32 %v662, %v666
    %670 = vrot.lane.b32.xlu0 %v668, 64
    %v671 = vpop.permute.xlu0 %670
    %v673 = vadd.f32 %v583, %v671
    %v674 = vtanh.pop %v673
    %v675 = vsub.f32 1.0, %v662
    %677 = vrot.lane.b32.xlu0 %v674, 96
    %v678 = vpop.permute.xlu0 %677
    %v680 = vmul.f32 %v675, %v678
    %v681 = vmul.f32 %v662, %v575
    %v682 = vadd.f32 %v680, %v681
    %684 = vrot.lane.b32.xlu0 %v682, 96
    %v685 = vpop.permute.xlu0 %684
    %s687 = scalar_lea.vmem [#allocation3], 24
    %688 = vst.msk [vmem:[%s687] sm:$0xff] %vm256, %v685
    %s689 = scalar_lea.vmem [#allocation2], 32
    %v690 = vld [vmem:[%s689] sm:$0xff]
    %v691 = vsel %vm256, %v685, 0
    %693 = vmatprep.subr.mxu0 0.0
    %694 = vmatpush1.msra.mxu0 0.0
    %695 = vmatprep.subr.mxu0 0.0
    %696 = vmatpush1.msra.mxu0 0.0
    %697 = vmatprep.subr.mxu0 0.0
    %698 = vmatpush1.msra.mxu0 0.0
    %699 = vmatprep.subr.mxu0 0.0
    %700 = vmatpush1.msra.mxu0 0.0
    %701 = vmatprep.subr.mxu0 0.0
    %702 = vmatpush1.msra.mxu0 0.0
    %703 = vmatprep.subr.mxu0 0.0
    %704 = vmatpush1.msra.mxu0 0.0
    %705 = vmatprep.subr.mxu0 0.0
    %706 = vmatpush1.msra.mxu0 0.0
    %707 = vmatprep.subr.mxu0 0.0
    %708 = vmatpush1.msra.mxu0 0.0
    %709 = vmatprep.subr.mxu0 0.0
    %710 = vmatpush1.msra.mxu0 0.0
    %711 = vmatprep.subr.mxu0 0.0
    %712 = vmatpush1.msra.mxu0 0.0
    %713 = vmatprep.subr.mxu0 0.0
    %714 = vmatpush1.msra.mxu0 0.0
    %715 = vmatprep.subr.mxu0 0.0
    %716 = vmatpush1.msra.mxu0 0.0
    %717 = vmatprep.subr.mxu0 0.0
    %718 = vmatpush1.msra.mxu0 %v247
    %719 = vmatprep.subr.mxu0 0.0
    %720 = vmatpush1.msra.mxu0 %v246
    %721 = vmatprep.subr.mxu0 0.0
    %722 = vmatpush1.msra.mxu0 %v245
    %723 = vmatprep.subr.mxu0 0.0
    %724 = vmatpush1.msra.mxu0 %v244
    %725 = vmatprep.subr.mxu0 0.0
    %726 = vmatpush2.msra.mxu0 0.0
    %727 = vmatprep.subr.mxu0 0.0
    %728 = vmatpush2.msra.mxu0 0.0
    %729 = vmatprep.subr.mxu0 0.0
    %730 = vmatpush2.msra.mxu0 0.0
    %731 = vmatprep.subr.mxu0 0.0
    %732 = vmatpush2.msra.mxu0 0.0
    %733 = vmatprep.subr.mxu0 0.0
    %734 = vmatpush2.msra.mxu0 0.0
    %735 = vmatprep.subr.mxu0 0.0
    %736 = vmatpush2.msra.mxu0 0.0
    %737 = vmatprep.subr.mxu0 0.0
    %738 = vmatpush2.msra.mxu0 0.0
    %739 = vmatprep.subr.mxu0 0.0
    %740 = vmatpush2.msra.mxu0 0.0
    %741 = vmatprep.subr.mxu0 0.0
    %742 = vmatpush2.msra.mxu0 0.0
    %743 = vmatprep.subr.mxu0 0.0
    %744 = vmatpush2.msra.mxu0 0.0
    %745 = vmatprep.subr.mxu0 0.0
    %746 = vmatpush2.msra.mxu0 0.0
    %747 = vmatprep.subr.mxu0 0.0
    %748 = vmatpush2.msra.mxu0 0.0
    %749 = vmatprep.subr.mxu0 0.0
    %750 = vmatpush2.msra.mxu0 0.0
    %751 = vmatprep.subr.mxu0 0.0
    %752 = vmatpush2.msra.mxu0 0.0
    %753 = vmatprep.subr.mxu0 0.0
    %754 = vmatpush2.msra.mxu0 0.0
    %755 = vmatprep.subr.mxu0 0.0
    %756 = vmatpush2.msra.mxu0 0.0
    %757 = vmatprep.mubr.f32.mxu0 0.0
    %758 = vmatmul.mubr.f32.gmra.mxu0 %v691
    %v759 = vpop.f32.mrf.mxu0
    %v760 = vadd.f32 0.0, %v759
    %v761 = vpop.f32.mrf.mxu0
    %762 = vdwg.mxu0
    %v763 = vadd.f32 %v690, %v760
    %v764 = vxor.u32 %v763, 2147483648
    %v765 = vmul.f32 %v764, 1.442695
    %v766 = vpow.pop %v765
    %v767 = vadd.f32 %v766, 1.0
    %v768 = vrcp.pop %v767
    %v769 = vmul.f32 1.0, %v768
    %v770 = vadd.f32 %v760, %v338
    %772 = vrot.lane.b32.xlu0 %v770, 64
    %v773 = vpop.permute.xlu0 %772
    %v775 = vmul.f32 %v769, %v773
    %777 = vrot.lane.b32.xlu0 %v775, 64
    %v778 = vpop.permute.xlu0 %777
    %v780 = vadd.f32 %v690, %v778
    %v781 = vtanh.pop %v780
    %v782 = vsub.f32 1.0, %v769
    %784 = vrot.lane.b32.xlu0 %v781, 96
    %v785 = vpop.permute.xlu0 %784
    %v787 = vmul.f32 %v782, %v785
    %v788 = vmul.f32 %v769, %v682
    %v789 = vadd.f32 %v787, %v788
    %791 = vrot.lane.b32.xlu0 %v789, 96
    %v792 = vpop.permute.xlu0 %791
    %s794 = scalar_lea.vmem [#allocation3], 32
    %795 = vst.msk [vmem:[%s794] sm:$0xff] %vm256, %v792
    %s796 = scalar_lea.vmem [#allocation2], 40
    %v797 = vld [vmem:[%s796] sm:$0xff]
    %v798 = vsel %vm256, %v792, 0
    %800 = vmatprep.subr.mxu0 0.0
    %801 = vmatpush1.msra.mxu0 0.0
    %802 = vmatprep.subr.mxu0 0.0
    %803 = vmatpush1.msra.mxu0 0.0
    %804 = vmatprep.subr.mxu0 0.0
    %805 = vmatpush1.msra.mxu0 0.0
    %806 = vmatprep.subr.mxu0 0.0
    %807 = vmatpush1.msra.mxu0 0.0
    %808 = vmatprep.subr.mxu0 0.0
    %809 = vmatpush1.msra.mxu0 0.0
    %810 = vmatprep.subr.mxu0 0.0
    %811 = vmatpush1.msra.mxu0 0.0
    %812 = vmatprep.subr.mxu0 0.0
    %813 = vmatpush1.msra.mxu0 0.0
    %814 = vmatprep.subr.mxu0 0.0
    %815 = vmatpush1.msra.mxu0 0.0
    %816 = vmatprep.subr.mxu0 0.0
    %817 = vmatpush1.msra.mxu0 0.0
    %818 = vmatprep.subr.mxu0 0.0
    %819 = vmatpush1.msra.mxu0 0.0
    %820 = vmatprep.subr.mxu0 0.0
    %821 = vmatpush1.msra.mxu0 0.0
    %822 = vmatprep.subr.mxu0 0.0
    %823 = vmatpush1.msra.mxu0 0.0
    %824 = vmatprep.subr.mxu0 0.0
    %825 = vmatpush1.msra.mxu0 %v247
    %826 = vmatprep.subr.mxu0 0.0
    %827 = vmatpush1.msra.mxu0 %v246
    %828 = vmatprep.subr.mxu0 0.0
    %829 = vmatpush1.msra.mxu0 %v245
    %830 = vmatprep.subr.mxu0 0.0
    %831 = vmatpush1.msra.mxu0 %v244
    %832 = vmatprep.subr.mxu0 0.0
    %833 = vmatpush2.msra.mxu0 0.0
    %834 = vmatprep.subr.mxu0 0.0
    %835 = vmatpush2.msra.mxu0 0.0
    %836 = vmatprep.subr.mxu0 0.0
    %837 = vmatpush2.msra.mxu0 0.0
    %838 = vmatprep.subr.mxu0 0.0
    %839 = vmatpush2.msra.mxu0 0.0
    %840 = vmatprep.subr.mxu0 0.0
    %841 = vmatpush2.msra.mxu0 0.0
    %842 = vmatprep.subr.mxu0 0.0
    %843 = vmatpush2.msra.mxu0 0.0
    %844 = vmatprep.subr.mxu0 0.0
    %845 = vmatpush2.msra.mxu0 0.0
    %846 = vmatprep.subr.mxu0 0.0
    %847 = vmatpush2.msra.mxu0 0.0
    %848 = vmatprep.subr.mxu0 0.0
    %849 = vmatpush2.msra.mxu0 0.0
    %850 = vmatprep.subr.mxu0 0.0
    %851 = vmatpush2.msra.mxu0 0.0
    %852 = vmatprep.subr.mxu0 0.0
    %853 = vmatpush2.msra.mxu0 0.0
    %854 = vmatprep.subr.mxu0 0.0
    %855 = vmatpush2.msra.mxu0 0.0
    %856 = vmatprep.subr.mxu0 0.0
    %857 = vmatpush2.msra.mxu0 0.0
    %858 = vmatprep.subr.mxu0 0.0
    %859 = vmatpush2.msra.mxu0 0.0
    %860 = vmatprep.subr.mxu0 0.0
    %861 = vmatpush2.msra.mxu0 0.0
    %862 = vmatprep.subr.mxu0 0.0
    %863 = vmatpush2.msra.mxu0 0.0
    %864 = vmatprep.mubr.f32.mxu0 0.0
    %865 = vmatmul.mubr.f32.gmra.mxu0 %v798
    %v866 = vpop.f32.mrf.mxu0
    %v867 = vadd.f32 0.0, %v866
    %v868 = vpop.f32.mrf.mxu0
    %869 = vdwg.mxu0
    %v870 = vadd.f32 %v797, %v867
    %v871 = vxor.u32 %v870, 2147483648
    %v872 = vmul.f32 %v871, 1.442695
    %v873 = vpow.pop %v872
    %v874 = vadd.f32 %v873, 1.0
    %v875 = vrcp.pop %v874
    %v876 = vmul.f32 1.0, %v875
    %v877 = vadd.f32 %v867, %v338
    %879 = vrot.lane.b32.xlu0 %v877, 64
    %v880 = vpop.permute.xlu0 %879
    %v882 = vmul.f32 %v876, %v880
    %884 = vrot.lane.b32.xlu0 %v882, 64
    %v885 = vpop.permute.xlu0 %884
    %v887 = vadd.f32 %v797, %v885
    %v888 = vtanh.pop %v887
    %v889 = vsub.f32 1.0, %v876
    %891 = vrot.lane.b32.xlu0 %v888, 96
    %v892 = vpop.permute.xlu0 %891
    %v894 = vmul.f32 %v889, %v892
    %v895 = vmul.f32 %v876, %v789
    %v896 = vadd.f32 %v894, %v895
    %898 = vrot.lane.b32.xlu0 %v896, 96
    %v899 = vpop.permute.xlu0 %898
    %s901 = scalar_lea.vmem [#allocation3], 40
    %902 = vst.msk [vmem:[%s901] sm:$0xff] %vm256, %v899
    %s903 = scalar_lea.vmem [#allocation2], 48
    %v904 = vld [vmem:[%s903] sm:$0xff]
    %v905 = vsel %vm256, %v899, 0
    %907 = vmatprep.subr.mxu0 0.0
    %908 = vmatpush1.msra.mxu0 0.0
    %909 = vmatprep.subr.mxu0 0.0
    %910 = vmatpush1.msra.mxu0 0.0
    %911 = vmatprep.subr.mxu0 0.0
    %912 = vmatpush1.msra.mxu0 0.0
    %913 = vmatprep.subr.mxu0 0.0
    %914 = vmatpush1.msra.mxu0 0.0
    %915 = vmatprep.subr.mxu0 0.0
    %916 = vmatpush1.msra.mxu0 0.0
    %917 = vmatprep.subr.mxu0 0.0
    %918 = vmatpush1.msra.mxu0 0.0
    %919 = vmatprep.subr.mxu0 0.0
    %920 = vmatpush1.msra.mxu0 0.0
    %921 = vmatprep.subr.mxu0 0.0
    %922 = vmatpush1.msra.mxu0 0.0
    %923 = vmatprep.subr.mxu0 0.0
    %924 = vmatpush1.msra.mxu0 0.0
    %925 = vmatprep.subr.mxu0 0.0
    %926 = vmatpush1.msra.mxu0 0.0
    %927 = vmatprep.subr.mxu0 0.0
    %928 = vmatpush1.msra.mxu0 0.0
    %929 = vmatprep.subr.mxu0 0.0
    %930 = vmatpush1.msra.mxu0 0.0
    %931 = vmatprep.subr.mxu0 0.0
    %932 = vmatpush1.msra.mxu0 %v247
    %933 = vmatprep.subr.mxu0 0.0
    %934 = vmatpush1.msra.mxu0 %v246
    %935 = vmatprep.subr.mxu0 0.0
    %936 = vmatpush1.msra.mxu0 %v245
    %937 = vmatprep.subr.mxu0 0.0
    %938 = vmatpush1.msra.mxu0 %v244
    %939 = vmatprep.subr.mxu0 0.0
    %940 = vmatpush2.msra.mxu0 0.0
    %941 = vmatprep.subr.mxu0 0.0
    %942 = vmatpush2.msra.mxu0 0.0
    %943 = vmatprep.subr.mxu0 0.0
    %944 = vmatpush2.msra.mxu0 0.0
    %945 = vmatprep.subr.mxu0 0.0
    %946 = vmatpush2.msra.mxu0 0.0
    %947 = vmatprep.subr.mxu0 0.0
    %948 = vmatpush2.msra.mxu0 0.0
    %949 = vmatprep.subr.mxu0 0.0
    %950 = vmatpush2.msra.mxu0 0.0
    %951 = vmatprep.subr.mxu0 0.0
    %952 = vmatpush2.msra.mxu0 0.0
    %953 = vmatprep.subr.mxu0 0.0
    %954 = vmatpush2.msra.mxu0 0.0
    %955 = vmatprep.subr.mxu0 0.0
    %956 = vmatpush2.msra.mxu0 0.0
    %957 = vmatprep.subr.mxu0 0.0
    %958 = vmatpush2.msra.mxu0 0.0
    %959 = vmatprep.subr.mxu0 0.0
    %960 = vmatpush2.msra.mxu0 0.0
    %961 = vmatprep.subr.mxu0 0.0
    %962 = vmatpush2.msra.mxu0 0.0
    %963 = vmatprep.subr.mxu0 0.0
    %964 = vmatpush2.msra.mxu0 0.0
    %965 = vmatprep.subr.mxu0 0.0
    %966 = vmatpush2.msra.mxu0 0.0
    %967 = vmatprep.subr.mxu0 0.0
    %968 = vmatpush2.msra.mxu0 0.0
    %969 = vmatprep.subr.mxu0 0.0
    %970 = vmatpush2.msra.mxu0 0.0
    %971 = vmatprep.mubr.f32.mxu0 0.0
    %972 = vmatmul.mubr.f32.gmra.mxu0 %v905
    %v973 = vpop.f32.mrf.mxu0
    %v974 = vadd.f32 0.0, %v973
    %v975 = vpop.f32.mrf.mxu0
    %976 = vdwg.mxu0
    %v977 = vadd.f32 %v904, %v974
    %v978 = vxor.u32 %v977, 2147483648
    %v979 = vmul.f32 %v978, 1.442695
    %v980 = vpow.pop %v979
    %v981 = vadd.f32 %v980, 1.0
    %v982 = vrcp.pop %v981
    %v983 = vmul.f32 1.0, %v982
    %v984 = vadd.f32 %v974, %v338
    %986 = vrot.lane.b32.xlu0 %v984, 64
    %v987 = vpop.permute.xlu0 %986
    %v989 = vmul.f32 %v983, %v987
    %991 = vrot.lane.b32.xlu0 %v989, 64
    %v992 = vpop.permute.xlu0 %991
    %v994 = vadd.f32 %v904, %v992
    %v995 = vtanh.pop %v994
    %v996 = vsub.f32 1.0, %v983
    %998 = vrot.lane.b32.xlu0 %v995, 96
    %v999 = vpop.permute.xlu0 %998
    %v1001 = vmul.f32 %v996, %v999
    %v1002 = vmul.f32 %v983, %v896
    %v1003 = vadd.f32 %v1001, %v1002
    %1005 = vrot.lane.b32.xlu0 %v1003, 96
    %v1006 = vpop.permute.xlu0 %1005
    %s1008 = scalar_lea.vmem [#allocation3], 48
    %1009 = vst.msk [vmem:[%s1008] sm:$0xff] %vm256, %v1006
    %s1010 = scalar_lea.vmem [#allocation2], 56
    %v1011 = vld [vmem:[%s1010] sm:$0xff]
    %v1012 = vsel %vm256, %v1006, 0
    %1014 = vmatprep.subr.mxu0 0.0
    %1015 = vmatpush1.msra.mxu0 0.0
    %1016 = vmatprep.subr.mxu0 0.0
    %1017 = vmatpush1.msra.mxu0 0.0
    %1018 = vmatprep.subr.mxu0 0.0
    %1019 = vmatpush1.msra.mxu0 0.0
    %1020 = vmatprep.subr.mxu0 0.0
    %1021 = vmatpush1.msra.mxu0 0.0
    %1022 = vmatprep.subr.mxu0 0.0
    %1023 = vmatpush1.msra.mxu0 0.0
    %1024 = vmatprep.subr.mxu0 0.0
    %1025 = vmatpush1.msra.mxu0 0.0
    %1026 = vmatprep.subr.mxu0 0.0
    %1027 = vmatpush1.msra.mxu0 0.0
    %1028 = vmatprep.subr.mxu0 0.0
    %1029 = vmatpush1.msra.mxu0 0.0
    %1030 = vmatprep.subr.mxu0 0.0
    %1031 = vmatpush1.msra.mxu0 0.0
    %1032 = vmatprep.subr.mxu0 0.0
    %1033 = vmatpush1.msra.mxu0 0.0
    %1034 = vmatprep.subr.mxu0 0.0
    %1035 = vmatpush1.msra.mxu0 0.0
    %1036 = vmatprep.subr.mxu0 0.0
    %1037 = vmatpush1.msra.mxu0 0.0
    %1038 = vmatprep.subr.mxu0 0.0
    %1039 = vmatpush1.msra.mxu0 %v247
    %1040 = vmatprep.subr.mxu0 0.0
    %1041 = vmatpush1.msra.mxu0 %v246
    %1042 = vmatprep.subr.mxu0 0.0
    %1043 = vmatpush1.msra.mxu0 %v245
    %1044 = vmatprep.subr.mxu0 0.0
    %1045 = vmatpush1.msra.mxu0 %v244
    %1046 = vmatprep.subr.mxu0 0.0
    %1047 = vmatpush2.msra.mxu0 0.0
    %1048 = vmatprep.subr.mxu0 0.0
    %1049 = vmatpush2.msra.mxu0 0.0
    %1050 = vmatprep.subr.mxu0 0.0
    %1051 = vmatpush2.msra.mxu0 0.0
    %1052 = vmatprep.subr.mxu0 0.0
    %1053 = vmatpush2.msra.mxu0 0.0
    %1054 = vmatprep.subr.mxu0 0.0
    %1055 = vmatpush2.msra.mxu0 0.0
    %1056 = vmatprep.subr.mxu0 0.0
    %1057 = vmatpush2.msra.mxu0 0.0
    %1058 = vmatprep.subr.mxu0 0.0
    %1059 = vmatpush2.msra.mxu0 0.0
    %1060 = vmatprep.subr.mxu0 0.0
    %1061 = vmatpush2.msra.mxu0 0.0
    %1062 = vmatprep.subr.mxu0 0.0
    %1063 = vmatpush2.msra.mxu0 0.0
    %1064 = vmatprep.subr.mxu0 0.0
    %1065 = vmatpush2.msra.mxu0 0.0
    %1066 = vmatprep.subr.mxu0 0.0
    %1067 = vmatpush2.msra.mxu0 0.0
    %1068 = vmatprep.subr.mxu0 0.0
    %1069 = vmatpush2.msra.mxu0 0.0
    %1070 = vmatprep.subr.mxu0 0.0
    %1071 = vmatpush2.msra.mxu0 0.0
    %1072 = vmatprep.subr.mxu0 0.0
    %1073 = vmatpush2.msra.mxu0 0.0
    %1074 = vmatprep.subr.mxu0 0.0
    %1075 = vmatpush2.msra.mxu0 0.0
    %1076 = vmatprep.subr.mxu0 0.0
    %1077 = vmatpush2.msra.mxu0 0.0
    %1078 = vmatprep.mubr.f32.mxu0 0.0
    %1079 = vmatmul.mubr.f32.gmra.mxu0 %v1012
    %v1080 = vpop.f32.mrf.mxu0
    %v1081 = vadd.f32 0.0, %v1080
    %v1082 = vpop.f32.mrf.mxu0
    %1083 = vdwg.mxu0
    %v1084 = vadd.f32 %v1011, %v1081
    %v1085 = vxor.u32 %v1084, 2147483648
    %v1086 = vmul.f32 %v1085, 1.442695
    %v1087 = vpow.pop %v1086
    %v1088 = vadd.f32 %v1087, 1.0
    %v1089 = vrcp.pop %v1088
    %v1090 = vmul.f32 1.0, %v1089
    %v1091 = vadd.f32 %v1081, %v338
    %1093 = vrot.lane.b32.xlu0 %v1091, 64
    %v1094 = vpop.permute.xlu0 %1093
    %v1096 = vmul.f32 %v1090, %v1094
    %1098 = vrot.lane.b32.xlu0 %v1096, 64
    %v1099 = vpop.permute.xlu0 %1098
    %v1101 = vadd.f32 %v1011, %v1099
    %v1102 = vtanh.pop %v1101
    %v1103 = vsub.f32 1.0, %v1090
    %1105 = vrot.lane.b32.xlu0 %v1102, 96
    %v1106 = vpop.permute.xlu0 %1105
    %v1108 = vmul.f32 %v1103, %v1106
    %v1109 = vmul.f32 %v1090, %v1003
    %v1110 = vadd.f32 %v1108, %v1109
    %1112 = vrot.lane.b32.xlu0 %v1110, 96
    %v1113 = vpop.permute.xlu0 %1112
    %s1115 = scalar_lea.vmem [#allocation3], 56
    %1116 = vst.msk [vmem:[%s1115] sm:$0xff] %vm256, %v1113
    %1117 = vst.msk [vmem:[#allocation4] sm:$0xff] %vm256, %v1113
    %v1118 = vld [vmem:[#allocation3] sm:$0xff]
    %v1119 = vld [vmem:[#allocation3 + $0x8] sm:$0xff]
    %v1120 = vld [vmem:[#allocation3 + $0x10] sm:$0xff]
    %v1121 = vld [vmem:[#allocation3 + $0x18] sm:$0xff]
    %v1122 = vld [vmem:[#allocation3 + $0x20] sm:$0xff]
    %v1123 = vld [vmem:[#allocation3 + $0x28] sm:$0xff]
    %v1124 = vld [vmem:[#allocation3 + $0x30] sm:$0xff]
    %v1125 = vld [vmem:[#allocation3 + $0x38] sm:$0xff]
    %v1126 = vld [vmem:[#allocation11] sm:$0xff]
    %v1127 = vld [vmem:[#allocation11 + $0x8] sm:$0xff]
    %v1128 = vld [vmem:[#allocation11 + $0x10] sm:$0xff]
    %v1129 = vld [vmem:[#allocation11 + $0x18] sm:$0xff]
    %v1130 = vld [vmem:[%s6] sm:$0x1]
    %v1132 = vlaneseq
    %v1133 = vshrl.u32 %v1132, 7
    %v1134 = vsub.s32 0, %v1133
    %v1135 = vrot.slane %v1130, %v1134
    %v1138 = vsel %vm256, %v1118, 0
    %v1141 = vsel %vm256, %v1119, 0
    %v1144 = vsel %vm256, %v1120, 0
    %v1147 = vsel %vm256, %v1121, 0
    %v1150 = vsel %vm256, %v1122, 0
    %v1153 = vsel %vm256, %v1123, 0
    %v1156 = vsel %vm256, %v1124, 0
    %v1159 = vsel %vm256, %v1125, 0
    %1161 = vmatprep.subr.mxu0 0.0
    %1162 = vmatpush1.msra.mxu0 0.0
    %1163 = vmatprep.subr.mxu0 0.0
    %1164 = vmatpush1.msra.mxu0 0.0
    %1165 = vmatprep.subr.mxu0 0.0
    %1166 = vmatpush1.msra.mxu0 0.0
    %1167 = vmatprep.subr.mxu0 0.0
    %1168 = vmatpush1.msra.mxu0 0.0
    %1169 = vmatprep.subr.mxu0 0.0
    %1170 = vmatpush1.msra.mxu0 0.0
    %1171 = vmatprep.subr.mxu0 0.0
    %1172 = vmatpush1.msra.mxu0 0.0
    %1173 = vmatprep.subr.mxu0 0.0
    %1174 = vmatpush1.msra.mxu0 0.0
    %1175 = vmatprep.subr.mxu0 0.0
    %1176 = vmatpush1.msra.mxu0 0.0
    %1177 = vmatprep.subr.mxu0 0.0
    %1178 = vmatpush1.msra.mxu0 0.0
    %1179 = vmatprep.subr.mxu0 0.0
    %1180 = vmatpush1.msra.mxu0 0.0
    %1181 = vmatprep.subr.mxu0 0.0
    %1182 = vmatpush1.msra.mxu0 0.0
    %1183 = vmatprep.subr.mxu0 0.0
    %1184 = vmatpush1.msra.mxu0 0.0
    %1185 = vmatprep.subr.mxu0 0.0
    %1186 = vmatpush1.msra.mxu0 %v1129
    %1187 = vmatprep.subr.mxu0 0.0
    %1188 = vmatpush1.msra.mxu0 %v1128
    %1189 = vmatprep.subr.mxu0 0.0
    %1190 = vmatpush1.msra.mxu0 %v1127
    %1191 = vmatprep.subr.mxu0 0.0
    %1192 = vmatpush1.msra.mxu0 %v1126
    %1193 = vmatprep.subr.mxu0 0.0
    %1194 = vmatpush2.msra.mxu0 0.0
    %1195 = vmatprep.subr.mxu0 0.0
    %1196 = vmatpush2.msra.mxu0 0.0
    %1197 = vmatprep.subr.mxu0 0.0
    %1198 = vmatpush2.msra.mxu0 0.0
    %1199 = vmatprep.subr.mxu0 0.0
    %1200 = vmatpush2.msra.mxu0 0.0
    %1201 = vmatprep.subr.mxu0 0.0
    %1202 = vmatpush2.msra.mxu0 0.0
    %1203 = vmatprep.subr.mxu0 0.0
    %1204 = vmatpush2.msra.mxu0 0.0
    %1205 = vmatprep.subr.mxu0 0.0
    %1206 = vmatpush2.msra.mxu0 0.0
    %1207 = vmatprep.subr.mxu0 0.0
    %1208 = vmatpush2.msra.mxu0 0.0
    %1209 = vmatprep.subr.mxu0 0.0
    %1210 = vmatpush2.msra.mxu0 0.0
    %1211 = vmatprep.subr.mxu0 0.0
    %1212 = vmatpush2.msra.mxu0 0.0
    %1213 = vmatprep.subr.mxu0 0.0
    %1214 = vmatpush2.msra.mxu0 0.0
    %1215 = vmatprep.subr.mxu0 0.0
    %1216 = vmatpush2.msra.mxu0 0.0
    %1217 = vmatprep.subr.mxu0 0.0
    %1218 = vmatpush2.msra.mxu0 0.0
    %1219 = vmatprep.subr.mxu0 0.0
    %1220 = vmatpush2.msra.mxu0 0.0
    %1221 = vmatprep.subr.mxu0 0.0
    %1222 = vmatpush2.msra.mxu0 0.0
    %1223 = vmatprep.subr.mxu0 0.0
    %1224 = vmatpush2.msra.mxu0 0.0
    %1225 = vmatprep.mubr.f32.mxu0 0.0
    %1226 = vmatmul.mubr.f32.gmra.mxu0 %v1138
    %v1227 = vpop.f32.mrf.mxu0
    %v1228 = vadd.f32 %v1135, %v1227
    %v1229 = vpop.f32.mrf.mxu0
    %1230 = vmatprep.mubr.f32.mxu0 0.0
    %1231 = vmatmul.mubr.f32.gmra.mxu0 %v1141
    %v1232 = vpop.f32.mrf.mxu0
    %v1233 = vadd.f32 %v1135, %v1232
    %v1234 = vpop.f32.mrf.mxu0
    %1235 = vmatprep.mubr.f32.mxu0 0.0
    %1236 = vmatmul.mubr.f32.gmra.mxu0 %v1144
    %v1237 = vpop.f32.mrf.mxu0
    %v1238 = vadd.f32 %v1135, %v1237
    %v1239 = vpop.f32.mrf.mxu0
    %1240 = vmatprep.mubr.f32.mxu0 0.0
    %1241 = vmatmul.mubr.f32.gmra.mxu0 %v1147
    %v1242 = vpop.f32.mrf.mxu0
    %v1243 = vadd.f32 %v1135, %v1242
    %v1244 = vpop.f32.mrf.mxu0
    %1245 = vmatprep.mubr.f32.mxu0 0.0
    %1246 = vmatmul.mubr.f32.gmra.mxu0 %v1150
    %v1247 = vpop.f32.mrf.mxu0
    %v1248 = vadd.f32 %v1135, %v1247
    %v1249 = vpop.f32.mrf.mxu0
    %1250 = vmatprep.mubr.f32.mxu0 0.0
    %1251 = vmatmul.mubr.f32.gmra.mxu0 %v1153
    %v1252 = vpop.f32.mrf.mxu0
    %v1253 = vadd.f32 %v1135, %v1252
    %v1254 = vpop.f32.mrf.mxu0
    %1255 = vmatprep.mubr.f32.mxu0 0.0
    %1256 = vmatmul.mubr.f32.gmra.mxu0 %v1156
    %v1257 = vpop.f32.mrf.mxu0
    %v1258 = vadd.f32 %v1135, %v1257
    %v1259 = vpop.f32.mrf.mxu0
    %1260 = vmatprep.mubr.f32.mxu0 0.0
    %1261 = vmatmul.mubr.f32.gmra.mxu0 %v1159
    %v1262 = vpop.f32.mrf.mxu0
    %v1263 = vadd.f32 %v1135, %v1262
    %v1264 = vpop.f32.mrf.mxu0
    %1265 = vdwg.mxu0
    %v1266 = vlaneseq
    %v1267 = vand.u32 %v1266, 127
    %vm1268 = vcmp.ge.s32.totalorder %v1267, 0
    %vm1269 = vcmp.lt.s32.totalorder %v1267, 3
    %vm1270 = vmand %vm1268, %vm1269
    %vm1271 = vcmp.ge.s32.totalorder %v1267, 3
    %vm1272 = vcmp.lt.s32.totalorder %v1267, 8
    %vm1273 = vmand %vm1271, %vm1272
    %vm1274 = vcmp.ge.s32.totalorder %v1267, 8
    %vm1275 = vcmp.lt.s32.totalorder %v1267, 12
    %vm1276 = vmand %vm1274, %vm1275
    %v1277 = vsel %vm1270, 1, 0
    %vm1278 = vcmp.eq.s32.totalorder %v1277, 1
    %v1279 = vsel %vm1278, %v1228, -inf
    %v1280 = vsel %vm1278, %v1233, -inf
    %v1281 = vsel %vm1278, %v1238, -inf
    %v1282 = vsel %vm1278, %v1243, -inf
    %v1283 = vsel %vm1278, %v1248, -inf
    %v1284 = vsel %vm1278, %v1253, -inf
    %v1285 = vsel %vm1278, %v1258, -inf
    %v1286 = vsel %vm1278, %v1263, -inf
    %1287 = vmax.xlane.f32.xlu0 %v1279
    %v1288 = vpop.xlane.xlu0 %1287
    %1289 = vmax.xlane.f32.xlu0 %v1280
    %v1290 = vpop.xlane.xlu0 %1289
    %1291 = vmax.xlane.f32.xlu0 %v1281
    %v1292 = vpop.xlane.xlu0 %1291
    %1293 = vmax.xlane.f32.xlu0 %v1282
    %v1294 = vpop.xlane.xlu0 %1293
    %1295 = vmax.xlane.f32.xlu0 %v1283
    %v1296 = vpop.xlane.xlu0 %1295
    %1297 = vmax.xlane.f32.xlu0 %v1284
    %v1298 = vpop.xlane.xlu0 %1297
    %1299 = vmax.xlane.f32.xlu0 %v1285
    %v1300 = vpop.xlane.xlu0 %1299
    %1301 = vmax.xlane.f32.xlu0 %v1286
    %v1302 = vpop.xlane.xlu0 %1301
    %v1303 = vsel %vm1278, %v1288, 0.0
    %v1304 = vsel %vm1278, %v1290, 0.0
    %v1305 = vsel %vm1278, %v1292, 0.0
    %v1306 = vsel %vm1278, %v1294, 0.0
    %v1307 = vsel %vm1278, %v1296, 0.0
    %v1308 = vsel %vm1278, %v1298, 0.0
    %v1309 = vsel %vm1278, %v1300, 0.0
    %v1310 = vsel %vm1278, %v1302, 0.0
    %v1311 = vadd.f32 %v1303, 0.0
    %v1312 = vadd.f32 %v1304, 0.0
    %v1313 = vadd.f32 %v1305, 0.0
    %v1314 = vadd.f32 %v1306, 0.0
    %v1315 = vadd.f32 %v1307, 0.0
    %v1316 = vadd.f32 %v1308, 0.0
    %v1317 = vadd.f32 %v1309, 0.0
    %v1318 = vadd.f32 %v1310, 0.0
    %v1319 = vsel %vm1273, 1, 0
    %vm1320 = vcmp.eq.s32.totalorder %v1319, 1
    %v1321 = vsel %vm1320, %v1228, -inf
    %v1322 = vsel %vm1320, %v1233, -inf
    %v1323 = vsel %vm1320, %v1238, -inf
    %v1324 = vsel %vm1320, %v1243, -inf
    %v1325 = vsel %vm1320, %v1248, -inf
    %v1326 = vsel %vm1320, %v1253, -inf
    %v1327 = vsel %vm1320, %v1258, -inf
    %v1328 = vsel %vm1320, %v1263, -inf
    %1329 = vmax.xlane.f32.xlu0 %v1321
    %v1330 = vpop.xlane.xlu0 %1329
    %1331 = vmax.xlane.f32.xlu0 %v1322
    %v1332 = vpop.xlane.xlu0 %1331
    %1333 = vmax.xlane.f32.xlu0 %v1323
    %v1334 = vpop.xlane.xlu0 %1333
    %1335 = vmax.xlane.f32.xlu0 %v1324
    %v1336 = vpop.xlane.xlu0 %1335
    %1337 = vmax.xlane.f32.xlu0 %v1325
    %v1338 = vpop.xlane.xlu0 %1337
    %1339 = vmax.xlane.f32.xlu0 %v1326
    %v1340 = vpop.xlane.xlu0 %1339
    %1341 = vmax.xlane.f32.xlu0 %v1327
    %v1342 = vpop.xlane.xlu0 %1341
    %1343 = vmax.xlane.f32.xlu0 %v1328
    %v1344 = vpop.xlane.xlu0 %1343
    %v1345 = vsel %vm1320, %v1330, 0.0
    %v1346 = vsel %vm1320, %v1332, 0.0
    %v1347 = vsel %vm1320, %v1334, 0.0
    %v1348 = vsel %vm1320, %v1336, 0.0
    %v1349 = vsel %vm1320, %v1338, 0.0
    %v1350 = vsel %vm1320, %v1340, 0.0
    %v1351 = vsel %vm1320, %v1342, 0.0
    %v1352 = vsel %vm1320, %v1344, 0.0
    %v1353 = vadd.f32 %v1311, %v1345
    %v1354 = vadd.f32 %v1312, %v1346
    %v1355 = vadd.f32 %v1313, %v1347
    %v1356 = vadd.f32 %v1314, %v1348
    %v1357 = vadd.f32 %v1315, %v1349
    %v1358 = vadd.f32 %v1316, %v1350
    %v1359 = vadd.f32 %v1317, %v1351
    %v1360 = vadd.f32 %v1318, %v1352
    %v1361 = vsel %vm1276, 1, 0
    %vm1362 = vcmp.eq.s32.totalorder %v1361, 1
    %v1363 = vsel %vm1362, %v1228, -inf
    %v1364 = vsel %vm1362, %v1233, -inf
    %v1365 = vsel %vm1362, %v1238, -inf
    %v1366 = vsel %vm1362, %v1243, -inf
    %v1367 = vsel %vm1362, %v1248, -inf
    %v1368 = vsel %vm1362, %v1253, -inf
    %v1369 = vsel %vm1362, %v1258, -inf
    %v1370 = vsel %vm1362, %v1263, -inf
    %1371 = vmax.xlane.f32.xlu0 %v1363
    %v1372 = vpop.xlane.xlu0 %1371
    %1373 = vmax.xlane.f32.xlu0 %v1364
    %v1374 = vpop.xlane.xlu0 %1373
    %1375 = vmax.xlane.f32.xlu0 %v1365
    %v1376 = vpop.xlane.xlu0 %1375
    %1377 = vmax.xlane.f32.xlu0 %v1366
    %v1378 = vpop.xlane.xlu0 %1377
    %1379 = vmax.xlane.f32.xlu0 %v1367
    %v1380 = vpop.xlane.xlu0 %1379
    %1381 = vmax.xlane.f32.xlu0 %v1368
    %v1382 = vpop.xlane.xlu0 %1381
    %1383 = vmax.xlane.f32.xlu0 %v1369
    %v1384 = vpop.xlane.xlu0 %1383
    %1385 = vmax.xlane.f32.xlu0 %v1370
    %v1386 = vpop.xlane.xlu0 %1385
    %v1387 = vsel %vm1362, %v1372, 0.0
    %v1388 = vsel %vm1362, %v1374, 0.0
    %v1389 = vsel %vm1362, %v1376, 0.0
    %v1390 = vsel %vm1362, %v1378, 0.0
    %v1391 = vsel %vm1362, %v1380, 0.0
    %v1392 = vsel %vm1362, %v1382, 0.0
    %v1393 = vsel %vm1362, %v1384, 0.0
    %v1394 = vsel %vm1362, %v1386, 0.0
    %v1395 = vadd.f32 %v1353, %v1387
    %v1396 = vadd.f32 %v1354, %v1388
    %v1397 = vadd.f32 %v1355, %v1389
    %v1398 = vadd.f32 %v1356, %v1390
    %v1399 = vadd.f32 %v1357, %v1391
    %v1400 = vadd.f32 %v1358, %v1392
    %v1401 = vadd.f32 %v1359, %v1393
    %v1402 = vadd.f32 %v1360, %v1394
    %v1403 = vsub.f32 %v1228, %v1395
    %v1404 = vsub.f32 %v1233, %v1396
    %v1405 = vsub.f32 %v1238, %v1397
    %v1406 = vsub.f32 %v1243, %v1398
    %v1407 = vsub.f32 %v1248, %v1399
    %v1408 = vsub.f32 %v1253, %v1400
    %v1409 = vsub.f32 %v1258, %v1401
    %v1410 = vsub.f32 %v1263, %v1402
    %v1411 = vmul.f32 %v1403, 1.442695
    %v1412 = vpow.pop %v1411
    %v1413 = vmul.f32 %v1404, 1.442695
    %v1414 = vpow.pop %v1413
    %v1415 = vmul.f32 %v1405, 1.442695
    %v1416 = vpow.pop %v1415
    %v1417 = vmul.f32 %v1406, 1.442695
    %v1418 = vpow.pop %v1417
    %v1419 = vmul.f32 %v1407, 1.442695
    %v1420 = vpow.pop %v1419
    %v1421 = vmul.f32 %v1408, 1.442695
    %v1422 = vpow.pop %v1421
    %v1423 = vmul.f32 %v1409, 1.442695
    %v1424 = vpow.pop %v1423
    %v1425 = vmul.f32 %v1410, 1.442695
    %v1426 = vpow.pop %v1425
    %v1427 = vsel %vm1278, %v1412, 0.0
    %v1428 = vsel %vm1278, %v1414, 0.0
    %v1429 = vsel %vm1278, %v1416, 0.0
    %v1430 = vsel %vm1278, %v1418, 0.0
    %v1431 = vsel %vm1278, %v1420, 0.0
    %v1432 = vsel %vm1278, %v1422, 0.0
    %v1433 = vsel %vm1278, %v1424, 0.0
    %v1434 = vsel %vm1278, %v1426, 0.0
    %1435 = vadd.xlane.f32.xlu0 %v1427
    %v1436 = vpop.xlane.xlu0 %1435
    %1437 = vadd.xlane.f32.xlu0 %v1428
    %v1438 = vpop.xlane.xlu0 %1437
    %1439 = vadd.xlane.f32.xlu0 %v1429
    %v1440 = vpop.xlane.xlu0 %1439
    %1441 = vadd.xlane.f32.xlu0 %v1430
    %v1442 = vpop.xlane.xlu0 %1441
    %1443 = vadd.xlane.f32.xlu0 %v1431
    %v1444 = vpop.xlane.xlu0 %1443
    %1445 = vadd.xlane.f32.xlu0 %v1432
    %v1446 = vpop.xlane.xlu0 %1445
    %1447 = vadd.xlane.f32.xlu0 %v1433
    %v1448 = vpop.xlane.xlu0 %1447
    %1449 = vadd.xlane.f32.xlu0 %v1434
    %v1450 = vpop.xlane.xlu0 %1449
    %v1451 = vsel %vm1278, %v1436, 0.0
    %v1452 = vsel %vm1278, %v1438, 0.0
    %v1453 = vsel %vm1278, %v1440, 0.0
    %v1454 = vsel %vm1278, %v1442, 0.0
    %v1455 = vsel %vm1278, %v1444, 0.0
    %v1456 = vsel %vm1278, %v1446, 0.0
    %v1457 = vsel %vm1278, %v1448, 0.0
    %v1458 = vsel %vm1278, %v1450, 0.0
    %v1459 = vadd.f32 %v1451, 0.0
    %v1460 = vadd.f32 %v1452, 0.0
    %v1461 = vadd.f32 %v1453, 0.0
    %v1462 = vadd.f32 %v1454, 0.0
    %v1463 = vadd.f32 %v1455, 0.0
    %v1464 = vadd.f32 %v1456, 0.0
    %v1465 = vadd.f32 %v1457, 0.0
    %v1466 = vadd.f32 %v1458, 0.0
    %v1467 = vsel %vm1320, %v1412, 0.0
    %v1468 = vsel %vm1320, %v1414, 0.0
    %v1469 = vsel %vm1320, %v1416, 0.0
    %v1470 = vsel %vm1320, %v1418, 0.0
    %v1471 = vsel %vm1320, %v1420, 0.0
    %v1472 = vsel %vm1320, %v1422, 0.0
    %v1473 = vsel %vm1320, %v1424, 0.0
    %v1474 = vsel %vm1320, %v1426, 0.0
    %1475 = vadd.xlane.f32.xlu0 %v1467
    %v1476 = vpop.xlane.xlu0 %1475
    %1477 = vadd.xlane.f32.xlu0 %v1468
    %v1478 = vpop.xlane.xlu0 %1477
    %1479 = vadd.xlane.f32.xlu0 %v1469
    %v1480 = vpop.xlane.xlu0 %1479
    %1481 = vadd.xlane.f32.xlu0 %v1470
    %v1482 = vpop.xlane.xlu0 %1481
    %1483 = vadd.xlane.f32.xlu0 %v1471
    %v1484 = vpop.xlane.xlu0 %1483
    %1485 = vadd.xlane.f32.xlu0 %v1472
    %v1486 = vpop.xlane.xlu0 %1485
    %1487 = vadd.xlane.f32.xlu0 %v1473
    %v1488 = vpop.xlane.xlu0 %1487
    %1489 = vadd.xlane.f32.xlu0 %v1474
    %v1490 = vpop.xlane.xlu0 %1489
    %v1491 = vsel %vm1320, %v1476, 0.0
    %v1492 = vsel %vm1320, %v1478, 0.0
    %v1493 = vsel %vm1320, %v1480, 0.0
    %v1494 = vsel %vm1320, %v1482, 0.0
    %v1495 = vsel %vm1320, %v1484, 0.0
    %v1496 = vsel %vm1320, %v1486, 0.0
    %v1497 = vsel %vm1320, %v1488, 0.0
    %v1498 = vsel %vm1320, %v1490, 0.0
    %v1499 = vadd.f32 %v1459, %v1491
    %v1500 = vadd.f32 %v1460, %v1492
    %v1501 = vadd.f32 %v1461, %v1493
    %v1502 = vadd.f32 %v1462, %v1494
    %v1503 = vadd.f32 %v1463, %v1495
    %v1504 = vadd.f32 %v1464, %v1496
    %v1505 = vadd.f32 %v1465, %v1497
    %v1506 = vadd.f32 %v1466, %v1498
    %v1507 = vsel %vm1362, %v1412, 0.0
    %v1508 = vsel %vm1362, %v1414, 0.0
    %v1509 = vsel %vm1362, %v1416, 0.0
    %v1510 = vsel %vm1362, %v1418, 0.0
    %v1511 = vsel %vm1362, %v1420, 0.0
    %v1512 = vsel %vm1362, %v1422, 0.0
    %v1513 = vsel %vm1362, %v1424, 0.0
    %v1514 = vsel %vm1362, %v1426, 0.0
    %1515 = vadd.xlane.f32.xlu0 %v1507
    %v1516 = vpop.xlane.xlu0 %1515
    %1517 = vadd.xlane.f32.xlu0 %v1508
    %v1518 = vpop.xlane.xlu0 %1517
    %1519 = vadd.xlane.f32.xlu0 %v1509
    %v1520 = vpop.xlane.xlu0 %1519
    %1521 = vadd.xlane.f32.xlu0 %v1510
    %v1522 = vpop.xlane.xlu0 %1521
    %1523 = vadd.xlane.f32.xlu0 %v1511
    %v1524 = vpop.xlane.xlu0 %1523
    %1525 = vadd.xlane.f32.xlu0 %v1512
    %v1526 = vpop.xlane.xlu0 %1525
    %1527 = vadd.xlane.f32.xlu0 %v1513
    %v1528 = vpop.xlane.xlu0 %1527
    %1529 = vadd.xlane.f32.xlu0 %v1514
    %v1530 = vpop.xlane.xlu0 %1529
    %v1531 = vsel %vm1362, %v1516, 0.0
    %v1532 = vsel %vm1362, %v1518, 0.0
    %v1533 = vsel %vm1362, %v1520, 0.0
    %v1534 = vsel %vm1362, %v1522, 0.0
    %v1535 = vsel %vm1362, %v1524, 0.0
    %v1536 = vsel %vm1362, %v1526, 0.0
    %v1537 = vsel %vm1362, %v1528, 0.0
    %v1538 = vsel %vm1362, %v1530, 0.0
    %v1539 = vadd.f32 %v1499, %v1531
    %v1540 = vadd.f32 %v1500, %v1532
    %v1541 = vadd.f32 %v1501, %v1533
    %v1542 = vadd.f32 %v1502, %v1534
    %v1543 = vadd.f32 %v1503, %v1535
    %v1544 = vadd.f32 %v1504, %v1536
    %v1545 = vadd.f32 %v1505, %v1537
    %v1546 = vadd.f32 %v1506, %v1538
    %v1547 = vsel %vm1275, 1, 0
    %vm1548 = vcmp.eq.s32.totalorder %v1547, 1
    %v1549 = vsel %vm1548, %v1539, 1.0
    %v1550 = vsel %vm1548, %v1540, 1.0
    %v1551 = vsel %vm1548, %v1541, 1.0
    %v1552 = vsel %vm1548, %v1542, 1.0
    %v1553 = vsel %vm1548, %v1543, 1.0
    %v1554 = vsel %vm1548, %v1544, 1.0
    %v1555 = vsel %vm1548, %v1545, 1.0
    %v1556 = vsel %vm1548, %v1546, 1.0
    %v1557 = vrcp.pop %v1549
    %v1558 = vrcp.pop %v1550
    %v1559 = vrcp.pop %v1551
    %v1560 = vrcp.pop %v1552
    %v1561 = vrcp.pop %v1553
    %v1562 = vrcp.pop %v1554
    %v1563 = vrcp.pop %v1555
    %v1564 = vrcp.pop %v1556
    %v1565 = vmul.f32 %v1412, %v1557
    %v1566 = vmul.f32 %v1414, %v1558
    %v1567 = vmul.f32 %v1416, %v1559
    %v1568 = vmul.f32 %v1418, %v1560
    %v1569 = vmul.f32 %v1420, %v1561
    %v1570 = vmul.f32 %v1422, %v1562
    %v1571 = vmul.f32 %v1424, %v1563
    %v1572 = vmul.f32 %v1426, %v1564
    %v1573 = vsel %vm1548, %v1565, 0.0
    %v1574 = vsel %vm1548, %v1566, 0.0
    %v1575 = vsel %vm1548, %v1567, 0.0
    %v1576 = vsel %vm1548, %v1568, 0.0
    %v1577 = vsel %vm1548, %v1569, 0.0
    %v1578 = vsel %vm1548, %v1570, 0.0
    %v1579 = vsel %vm1548, %v1571, 0.0
    %v1580 = vsel %vm1548, %v1572, 0.0
    %1581 = vst [vmem:[#allocation13] sm:$0xff] %v1573
    %1582 = vst [vmem:[#allocation13 + $0x8] sm:$0xff] %v1574
    %1583 = vst [vmem:[#allocation13 + $0x10] sm:$0xff] %v1575
    %1584 = vst [vmem:[#allocation13 + $0x18] sm:$0xff] %v1576
    %1585 = vst [vmem:[#allocation13 + $0x20] sm:$0xff] %v1577
    %1586 = vst [vmem:[#allocation13 + $0x28] sm:$0xff] %v1578
    %1587 = vst [vmem:[#allocation13 + $0x30] sm:$0xff] %v1579
    %1588 = vst [vmem:[#allocation13 + $0x38] sm:$0xff] %v1580
    // Predicated region
    $region50: #{tpu_custom_call.1} parent=1 // pred_check
      _
    $region51: #{tpu_custom_call.1} parent=1 // pred_check_branch
      %1590 = sbr.rel (0) target = $region53
    $region52: #{tpu_custom_call.1} parent=1 // pred_region
      %s1592 = ssub.s32 1024, 1024
      %1593 = vsyncadd [#allocation7], %s1592
      %s1594 = sshll.u32 [#allocation13], 4
      %s1595 = int_to_ptr.vmem [resolvable:$true] %s1594
      %1600 = dma.vmem_to_hbm [thread:$0]  %s1595, 1024, %s7, [#allocation7], 128, 128, 8
    $region53: #{tpu_custom_call.1} parent=1 // pred_fallthru
      _
    // Predicated region
    $region54: #{tpu_custom_call.1} parent=1 // pred_check
      _
    $region55: #{tpu_custom_call.1} parent=1 // pred_check_branch
      %1602 = sbr.rel (0) target = $region57
    $region56: #{tpu_custom_call.1} parent=1 // pred_region
      %1603 = dma.done [#allocation7], 1024
    $region57: #{tpu_custom_call.1} parent=1 // pred_fallthru
      _
    %1604 = vsyncpa [#allocation6], 1
    %1605 = vsyncpa [#allocation9], 1
    %1606 = vsyncpa [#allocation12], 1
    %1607 = vsyncpa [#allocation7], 1

</llo_original>
